<compile_context>
chip_gen: v6e
topology: v6e:2x2x1
jax: 0.10.0
libtpu: 0.0.40
codegen_flags: <defaults>
</compile_context>

<pallas_src>
import jax
import jax.numpy as jnp
from jax.experimental import pallas as pl
from jax.experimental.pallas import tpu as pltpu

MU_INIT = 0.0
LOGVAR_INIT = -5.0


def _round_up(n, m):
    return ((n + m - 1) // m) * m


def _bayes_linear_kernel(wmu_t_ref, wstd_ref, bmu_ref, bstd_ref,
                         x_ref, x3_ref, epsw_ref, epsb_ref, out_ref):
    # wmu_t_ref : (I, O_pad)      weight_mu^T, resident (constant index map)
    # wstd_ref  : (O_pad, I)      exp(0.5*weight_logvar), resident
    # bmu_ref   : (1, O_pad)      bias_mu
    # bstd_ref  : (1, O_pad)      exp(0.5*bias_logvar)
    # x_ref     : (TB, I)         batch tile of inputs (matmul layout)
    # x3_ref    : (TB, 1, I)      same values, broadcast layout
    # epsw_ref  : (TB, O_pad, I)  per-sample weight noise, bf16
    # epsb_ref  : (TB, O_pad)     per-sample bias noise
    # out_ref   : (TB, O_pad)
    x = x_ref[...]                                                  # (TB, I) f32

    # Shared mean term: one full-width MXU matmul for the whole batch tile.
    mean = jnp.dot(x, wmu_t_ref[...],
                   preferred_element_type=jnp.float32)              # (TB, O_pad)

    # Per-sample weight-noise term: sum_i std[o,i] * eps[b,o,i] * x[b,i].
    eps = epsw_ref[...].astype(jnp.float32)                         # (TB, O_pad, I)
    prod = (wstd_ref[...] * eps) * x3_ref[...]                      # (TB, O_pad, I)
    noise = jnp.sum(prod, axis=-1)                                  # (TB, O_pad)

    # Per-sample bias.
    bias = bmu_ref[...] + bstd_ref[...] * epsb_ref[...]             # (TB, O_pad)

    out_ref[...] = (mean + noise + bias).astype(out_ref.dtype)


def bayesian_linear_forward(x, weight_mu, weight_logvar, bias_mu, bias_logvar,
                            eps_w, eps_b, *, batch_block=8):
    """x: (B, I) f32; weight_*: (O, I); bias_*: (O,);
    eps_w: (B, O, I) (f32 or bf16 - stored as bf16 internally); eps_b: (B, O)."""
    assert batch_block % 8 == 0, "batch tile must be a multiple of 8 sublanes"
    B, I = x.shape
    O = weight_mu.shape[0]
    TB = batch_block
    B_pad = _round_up(B, TB)
    O_pad = _round_up(O, 128)          # lane-dense output stores
    f32 = jnp.float32

    # Hoisted reparameterization std (runs once per call, not per batch tile).
    w_std = jnp.exp(0.5 * weight_logvar.astype(f32))                 # (O, I)
    b_std = jnp.exp(0.5 * bias_logvar.astype(f32))                   # (O,)

    # Layout plumbing (cheap, one-time): pre-transpose W_mu, pad O->O_pad, B->B_pad.
    wmu_t = jnp.pad(weight_mu.astype(f32).T, ((0, 0), (0, O_pad - O)))    # (I, O_pad)
    wstd_p = jnp.pad(w_std, ((0, O_pad - O), (0, 0)))                     # (O_pad, I)
    bmu_p = jnp.pad(bias_mu.astype(f32), (0, O_pad - O)).reshape(1, O_pad)
    bstd_p = jnp.pad(b_std, (0, O_pad - O)).reshape(1, O_pad)

    x_p = jnp.pad(x.astype(f32), ((0, B_pad - B), (0, 0)))                # (B_pad, I)
    x3_p = x_p.reshape(B_pad, 1, I)                                       # broadcast layout

    eps_w_p = jnp.pad(eps_w.astype(jnp.bfloat16),
                      ((0, B_pad - B), (0, O_pad - O), (0, 0)))           # (B_pad, O_pad, I) bf16
    eps_b_p = jnp.pad(eps_b.astype(f32),
                      ((0, B_pad - B), (0, O_pad - O)))                   # (B_pad, O_pad)

    nb = B_pad // TB
    out = pl.pallas_call(
        _bayes_linear_kernel,
        out_shape=jax.ShapeDtypeStruct((B_pad, O_pad), f32),
        grid_spec=pltpu.PrefetchScalarGridSpec(
            num_scalar_prefetch=0,
            grid=(nb,),
            in_specs=[
                pl.BlockSpec((I, O_pad), lambda b: (0, 0)),        # W_mu^T (resident)
                pl.BlockSpec((O_pad, I), lambda b: (0, 0)),        # W std  (resident)
                pl.BlockSpec((1, O_pad), lambda b: (0, 0)),        # bias mu
                pl.BlockSpec((1, O_pad), lambda b: (0, 0)),        # bias std
                pl.BlockSpec((TB, I), lambda b: (b, 0)),           # x tile (matmul)
                pl.BlockSpec((TB, 1, I), lambda b: (b, 0, 0)),     # x tile (broadcast)
                pl.BlockSpec((TB, O_pad, I), lambda b: (b, 0, 0)), # eps_w tile (bf16)
                pl.BlockSpec((TB, O_pad), lambda b: (b, 0)),       # eps_b tile
            ],
            out_specs=pl.BlockSpec((TB, O_pad), lambda b: (b, 0)),
        ),
        compiler_params=pltpu.CompilerParams(
            dimension_semantics=("parallel",)),
    )(wmu_t, wstd_p, bmu_p, bstd_p, x_p, x3_p, eps_w_p, eps_b_p)
    return out[:B, :O]


def _reference_forward(x, weight_mu, weight_logvar, bias_mu, bias_logvar,
                       eps_w, eps_b):
    # Straightforward transcription of the torch module's forward.
    w_std = jnp.exp(0.5 * weight_logvar)
    b_std = jnp.exp(0.5 * bias_logvar)
    weights = weight_mu[None] + w_std[None] * eps_w.astype(jnp.float32)   # (B, O, I)
    biases = bias_mu[None] + b_std[None] * eps_b                          # (B, O)
    return jnp.einsum("boi,bi->bo", weights, x) + biases


if __name__ == "__main__":
    key = jax.random.PRNGKey(0)
    k_wmu, k_wlv, k_bmu, k_blv, k_x, k_ew, k_eb = jax.random.split(key, 7)

    batch = 6
    in_features = 32
    out_features = 24

    # Deterministic parameter init mirroring the torch module's __init__.
    weight_mu = MU_INIT + 0.1 * jax.random.normal(
        k_wmu, (out_features, in_features), jnp.float32)
    weight_logvar = LOGVAR_INIT + 0.1 * jax.random.normal(
        k_wlv, (out_features, in_features), jnp.float32)
    bias_mu = MU_INIT + 0.1 * jax.random.normal(
        k_bmu, (out_features,), jnp.float32)
    bias_logvar = LOGVAR_INIT + 0.1 * jax.random.normal(
        k_blv, (out_features,), jnp.float32)

    x = jax.random.normal(k_x, (batch, in_features), jnp.float32)

    # Reparameterization noise (torch.randn in forward), drawn deterministically.
    # eps_w is the dominant HBM stream (B x O x I) -> stored compactly as bf16.
    eps_w = jax.random.normal(
        k_ew, (batch, out_features, in_features), jnp.float32).astype(jnp.bfloat16)
    eps_b = jax.random.normal(k_eb, (batch, out_features), jnp.float32)

    out = bayesian_linear_forward(
        x, weight_mu, weight_logvar, bias_mu, bias_logvar, eps_w, eps_b)
    out = jax.block_until_ready(out)

    ref = _reference_forward(
        x, weight_mu, weight_logvar, bias_mu, bias_logvar, eps_w, eps_b)
    assert out.shape == (batch, out_features)
    max_err = float(jnp.max(jnp.abs(out - ref)))
    assert jnp.allclose(out, ref, atol=5e-4, rtol=5e-4), max_err

    print("KERNEL_OK")
</pallas_src>

<mosaic_0001>
module attributes {stable_mosaic.version = 11 : i64} {
  func.func @_bayes_linear_kernel(%arg0: i32, %arg1: memref<32x128xf32, #tpu.memory_space<vmem>>, %arg2: memref<128x32xf32, #tpu.memory_space<vmem>>, %arg3: memref<1x128xf32, #tpu.memory_space<vmem>>, %arg4: memref<1x128xf32, #tpu.memory_space<vmem>>, %arg5: memref<8x32xf32, #tpu.memory_space<vmem>>, %arg6: memref<8x1x32xf32, #tpu.memory_space<vmem>>, %arg7: memref<8x128x32xbf16, #tpu.memory_space<vmem>>, %arg8: memref<8x128xf32, #tpu.memory_space<vmem>>, %arg9: memref<8x128xf32, #tpu.memory_space<vmem>>) attributes {dimension_semantics = [#tpu.dimension_semantics<parallel>], iteration_bounds = array<i64: 1>, scalar_prefetch = 0 : i64, scratch_operands = 0 : i64, tpu.core_type = #tpu.core_type<tc>, window_params = [{pipeline_mode = #tpu.pipeline_mode<synchronous>, transform_indices = @transform_0, window_bounds = array<i64: 32, 128>}, {pipeline_mode = #tpu.pipeline_mode<synchronous>, transform_indices = @transform_1, window_bounds = array<i64: 128, 32>}, {pipeline_mode = #tpu.pipeline_mode<synchronous>, transform_indices = @transform_2, window_bounds = array<i64: 1, 128>}, {pipeline_mode = #tpu.pipeline_mode<synchronous>, transform_indices = @transform_3, window_bounds = array<i64: 1, 128>}, {transform_indices = @transform_4, window_bounds = array<i64: 8, 32>}, {transform_indices = @transform_5, window_bounds = array<i64: 8, 1, 32>}, {transform_indices = @transform_6, window_bounds = array<i64: 8, 128, 32>}, {transform_indices = @transform_7, window_bounds = array<i64: 8, 128>}, {transform_indices = @transform_8, window_bounds = array<i64: 8, 128>}]} {
    %c0 = arith.constant 0 : index
    %c0_0 = arith.constant 0 : index
    %0 = vector.load %arg5[%c0, %c0_0] : memref<8x32xf32, #tpu.memory_space<vmem>>, vector<8x32xf32>
    %c0_1 = arith.constant 0 : index
    %c0_2 = arith.constant 0 : index
    %1 = vector.load %arg1[%c0_1, %c0_2] : memref<32x128xf32, #tpu.memory_space<vmem>>, vector<32x128xf32>
    %cst = arith.constant dense<0.000000e+00> : vector<8x128xf32>
    %2 = tpu.matmul %0, %1, %cst {dimension_numbers = #tpu.dot_dimension_numbers<[1], [0], [0], [1], [0, 0, 1, 1], [], []>} : vector<8x32xf32>, vector<32x128xf32>, vector<8x128xf32> -> vector<8x128xf32>
    %c0_3 = arith.constant 0 : index
    %c0_4 = arith.constant 0 : index
    %c0_5 = arith.constant 0 : index
    %3 = vector.load %arg7[%c0_3, %c0_4, %c0_5] : memref<8x128x32xbf16, #tpu.memory_space<vmem>>, vector<8x128x32xbf16>
    %4 = arith.extf %3 : vector<8x128x32xbf16> to vector<8x128x32xf32>
    %c0_6 = arith.constant 0 : index
    %c0_7 = arith.constant 0 : index
    %5 = vector.load %arg2[%c0_6, %c0_7] : memref<128x32xf32, #tpu.memory_space<vmem>>, vector<128x32xf32>
    %6 = vector.shape_cast %5 : vector<128x32xf32> to vector<1x128x32xf32>
    %7 = vector.broadcast %6 : vector<1x128x32xf32> to vector<8x128x32xf32>
    %8 = arith.mulf %7, %4 : vector<8x128x32xf32>
    %c0_8 = arith.constant 0 : index
    %c0_9 = arith.constant 0 : index
    %c0_10 = arith.constant 0 : index
    %9 = vector.load %arg6[%c0_8, %c0_9, %c0_10] : memref<8x1x32xf32, #tpu.memory_space<vmem>>, vector<8x1x32xf32>
    %10 = vector.broadcast %9 : vector<8x1x32xf32> to vector<8x128x32xf32>
    %11 = arith.mulf %8, %10 : vector<8x128x32xf32>
    %cst_11 = arith.constant dense<0.000000e+00> : vector<8x128xf32>
    %12 = vector.multi_reduction <add>, %11, %cst_11 [2] : vector<8x128x32xf32> to vector<8x128xf32>
    %c0_12 = arith.constant 0 : index
    %c0_13 = arith.constant 0 : index
    %13 = vector.load %arg3[%c0_12, %c0_13] : memref<1x128xf32, #tpu.memory_space<vmem>>, vector<1x128xf32>
    %c0_14 = arith.constant 0 : index
    %c0_15 = arith.constant 0 : index
    %14 = vector.load %arg4[%c0_14, %c0_15] : memref<1x128xf32, #tpu.memory_space<vmem>>, vector<1x128xf32>
    %c0_16 = arith.constant 0 : index
    %c0_17 = arith.constant 0 : index
    %15 = vector.load %arg8[%c0_16, %c0_17] : memref<8x128xf32, #tpu.memory_space<vmem>>, vector<8x128xf32>
    %16 = vector.broadcast %14 : vector<1x128xf32> to vector<8x128xf32>
    %17 = arith.mulf %16, %15 : vector<8x128xf32>
    %18 = vector.broadcast %13 : vector<1x128xf32> to vector<8x128xf32>
    %19 = arith.addf %18, %17 : vector<8x128xf32>
    %20 = arith.addf %2, %12 : vector<8x128xf32>
    %21 = arith.addf %20, %19 : vector<8x128xf32>
    %c0_18 = arith.constant 0 : index
    %c0_19 = arith.constant 0 : index
    %22 = vector.load %arg9[%c0_18, %c0_19] : memref<8x128xf32, #tpu.memory_space<vmem>>, vector<8x128xf32>
    tpu.vector_store %arg9[%c0_18, %c0_19], %21 {strides = array<i32>} : memref<8x128xf32, #tpu.memory_space<vmem>>, vector<8x128xf32>,
    return
  }
  func.func @transform_0(%arg0: i32) -> (i32, i32) {
    %c0_i32 = arith.constant 0 : i32
    %c0_i32_0 = arith.constant 0 : i32
    %c0_i32_1 = arith.constant 0 : i32
    return %c0_i32, %c0_i32_0 : i32, i32
  }
  func.func @transform_1(%arg0: i32) -> (i32, i32) {
    %c0_i32 = arith.constant 0 : i32
    %c0_i32_0 = arith.constant 0 : i32
    %c0_i32_1 = arith.constant 0 : i32
    return %c0_i32, %c0_i32_0 : i32, i32
  }
  func.func @transform_2(%arg0: i32) -> (i32, i32) {
    %c0_i32 = arith.constant 0 : i32
    %c0_i32_0 = arith.constant 0 : i32
    %c0_i32_1 = arith.constant 0 : i32
    return %c0_i32, %c0_i32_0 : i32, i32
  }
  func.func @transform_3(%arg0: i32) -> (i32, i32) {
    %c0_i32 = arith.constant 0 : i32
    %c0_i32_0 = arith.constant 0 : i32
    %c0_i32_1 = arith.constant 0 : i32
    return %c0_i32, %c0_i32_0 : i32, i32
  }
  func.func @transform_4(%arg0: i32) -> (i32, i32) {
    %c0_i32 = arith.constant 0 : i32
    %c0_i32_0 = arith.constant 0 : i32
    return %arg0, %c0_i32 : i32, i32
  }
  func.func @transform_5(%arg0: i32) -> (i32, i32, i32) {
    %c0_i32 = arith.constant 0 : i32
    %c0_i32_0 = arith.constant 0 : i32
    %c0_i32_1 = arith.constant 0 : i32
    return %arg0, %c0_i32, %c0_i32_0 : i32, i32, i32
  }
  func.func @transform_6(%arg0: i32) -> (i32, i32, i32) {
    %c0_i32 = arith.constant 0 : i32
    %c0_i32_0 = arith.constant 0 : i32
    %c0_i32_1 = arith.constant 0 : i32
    return %arg0, %c0_i32, %c0_i32_0 : i32, i32, i32
  }
  func.func @transform_7(%arg0: i32) -> (i32, i32) {
    %c0_i32 = arith.constant 0 : i32
    %c0_i32_0 = arith.constant 0 : i32
    return %arg0, %c0_i32 : i32, i32
  }
  func.func @transform_8(%arg0: i32) -> (i32, i32) {
    %c0_i32 = arith.constant 0 : i32
    %c0_i32_0 = arith.constant 0 : i32
    return %arg0, %c0_i32 : i32, i32
  }
}

</mosaic_0001>

<llo_original>
// kernel: tpu_custom_call.1
$region0: #{tpu_custom_call.1}
  #allocation0 [shape = 'u32[]', space=smem, size = 0x4, offset = 0x4, fixed_abs, tag = 'smem constant byte address 0x4 - core index']
  #allocation1 [shape = 'u32[144,128]{1,0:T(1,128)}', space=vmem, size = 0x12000, scoped, tag = 'internal scratch']
  %s0 = inlined_call_operand.vmem [shape: f32[32,128], index: 0, kind: input, shape index: {}]
  %s1 = inlined_call_operand.vmem [shape: f32[128,32], index: 1, kind: input, shape index: {}]
  %s2 = inlined_call_operand.vmem [shape: f32[1,128], index: 2, kind: input, shape index: {}]
  %s3 = inlined_call_operand.vmem [shape: f32[1,128], index: 3, kind: input, shape index: {}]
  %s4 = inlined_call_operand.vmem [shape: f32[8,32], index: 4, kind: input, shape index: {}]
  %s5 = inlined_call_operand.vmem [shape: f32[8,1,32], index: 5, kind: input, shape index: {}]
  %s6 = inlined_call_operand.vmem [shape: bf16[8,128,32], index: 6, kind: input, shape index: {}]
  %s7 = inlined_call_operand.vmem [shape: f32[8,128], index: 7, kind: input, shape index: {}]
  %s8 = inlined_call_operand.hbm [shape: f32[8,128], index: 8, kind: output, shape index: {}]
  %s9 = sld [smem:[#allocation0]]
  $region42: #{tpu_custom_call.1} parent=0
    _
  %s11 = ssub.s32 1, %s9
  %s12 = scalar_select 0, %s11, %s9
  $region1: #{tpu_custom_call.1} parent=0
    #allocation2 [shape = 'u8[4096]{0}', space=vmem, size = 0x1000, scoped, tag = 'output window, operand 0, single buffered']
    #allocation3 [shape = 's32[1]{0}', space=sflag, size = 0x4, scoped, tag = 'scoped memory for tpu_custom_call.1']
    %13 = vsyncpa [#allocation3], 0
    // Predicated region
    $region2: #{tpu_custom_call.1} parent=1 // pred_check
      _
    $region3: #{tpu_custom_call.1} parent=1 // pred_check_branch
      %15 = sbr.rel (0) target = $region5
    $region4: #{tpu_custom_call.1} parent=1 // pred_region
      _
    $region5: #{tpu_custom_call.1} parent=1 // pred_fallthru
      _
    // Predicated region
    $region6: #{tpu_custom_call.1} parent=1 // pred_check
      _
    $region7: #{tpu_custom_call.1} parent=1 // pred_check_branch
      %17 = sbr.rel (0) target = $region9
    $region8: #{tpu_custom_call.1} parent=1 // pred_region
      _
    $region9: #{tpu_custom_call.1} parent=1 // pred_fallthru
      _
    // Predicated region
    $region10: #{tpu_custom_call.1} parent=1 // pred_check
      _
    $region11: #{tpu_custom_call.1} parent=1 // pred_check_branch
      %19 = sbr.rel (0) target = $region13
    $region12: #{tpu_custom_call.1} parent=1 // pred_region
      _
    $region13: #{tpu_custom_call.1} parent=1 // pred_fallthru
      _
    // Predicated region
    $region14: #{tpu_custom_call.1} parent=1 // pred_check
      _
    $region15: #{tpu_custom_call.1} parent=1 // pred_check_branch
      %21 = sbr.rel (0) target = $region17
    $region16: #{tpu_custom_call.1} parent=1 // pred_region
      _
    $region17: #{tpu_custom_call.1} parent=1 // pred_fallthru
      _
    // Predicated region
    $region18: #{tpu_custom_call.1} parent=1 // pred_check
      _
    $region19: #{tpu_custom_call.1} parent=1 // pred_check_branch
      %23 = sbr.rel (0) target = $region21
    $region20: #{tpu_custom_call.1} parent=1 // pred_region
      _
    $region21: #{tpu_custom_call.1} parent=1 // pred_fallthru
      _
    // Predicated region
    $region22: #{tpu_custom_call.1} parent=1 // pred_check
      _
    $region23: #{tpu_custom_call.1} parent=1 // pred_check_branch
      %25 = sbr.rel (0) target = $region25
    $region24: #{tpu_custom_call.1} parent=1 // pred_region
      _
    $region25: #{tpu_custom_call.1} parent=1 // pred_fallthru
      _
    // Predicated region
    $region26: #{tpu_custom_call.1} parent=1 // pred_check
      _
    $region27: #{tpu_custom_call.1} parent=1 // pred_check_branch
      %27 = sbr.rel (0) target = $region29
    $region28: #{tpu_custom_call.1} parent=1 // pred_region
      _
    $region29: #{tpu_custom_call.1} parent=1 // pred_fallthru
      _
    // Predicated region
    $region30: #{tpu_custom_call.1} parent=1 // pred_check
      _
    $region31: #{tpu_custom_call.1} parent=1 // pred_check_branch
      %29 = sbr.rel (0) target = $region33
    $region32: #{tpu_custom_call.1} parent=1 // pred_region
      _
    $region33: #{tpu_custom_call.1} parent=1 // pred_fallthru
      _
    %v30 = vld [vmem:[%s4] sm:$0xff]
    %v31 = vld [vmem:[%s0] sm:$0xff]
    %v32 = vld [vmem:[%s0 + $0x8] sm:$0xff]
    %v33 = vld [vmem:[%s0 + $0x10] sm:$0xff]
    %v34 = vld [vmem:[%s0 + $0x18] sm:$0xff]
    %v35 = vld [vmem:[%s6] sm:$0xf]
    %v36 = vld [vmem:[%s6 + $0x4] sm:$0xf]
    %v37 = vld [vmem:[%s6 + $0x8] sm:$0xf]
    %v38 = vld [vmem:[%s6 + $0xc] sm:$0xf]
    %v39 = vld [vmem:[%s6 + $0x10] sm:$0xf]
    %v40 = vld [vmem:[%s6 + $0x14] sm:$0xf]
    %v41 = vld [vmem:[%s6 + $0x18] sm:$0xf]
    %v42 = vld [vmem:[%s6 + $0x1c] sm:$0xf]
    %v43 = vld [vmem:[%s6 + $0x20] sm:$0xf]
    %v44 = vld [vmem:[%s6 + $0x24] sm:$0xf]
    %v45 = vld [vmem:[%s6 + $0x28] sm:$0xf]
    %v46 = vld [vmem:[%s6 + $0x2c] sm:$0xf]
    %v47 = vld [vmem:[%s6 + $0x30] sm:$0xf]
    %v48 = vld [vmem:[%s6 + $0x34] sm:$0xf]
    %v49 = vld [vmem:[%s6 + $0x38] sm:$0xf]
    %v50 = vld [vmem:[%s6 + $0x3c] sm:$0xf]
    %v51 = vld [vmem:[%s6 + $0x40] sm:$0xf]
    %v52 = vld [vmem:[%s6 + $0x44] sm:$0xf]
    %v53 = vld [vmem:[%s6 + $0x48] sm:$0xf]
    %v54 = vld [vmem:[%s6 + $0x4c] sm:$0xf]
    %v55 = vld [vmem:[%s6 + $0x50] sm:$0xf]
    %v56 = vld [vmem:[%s6 + $0x54] sm:$0xf]
    %v57 = vld [vmem:[%s6 + $0x58] sm:$0xf]
    %v58 = vld [vmem:[%s6 + $0x5c] sm:$0xf]
    %v59 = vld [vmem:[%s6 + $0x60] sm:$0xf]
    %v60 = vld [vmem:[%s6 + $0x64] sm:$0xf]
    %v61 = vld [vmem:[%s6 + $0x68] sm:$0xf]
    %v62 = vld [vmem:[%s6 + $0x6c] sm:$0xf]
    %v63 = vld [vmem:[%s6 + $0x70] sm:$0xf]
    %v64 = vld [vmem:[%s6 + $0x74] sm:$0xf]
    %v65 = vld [vmem:[%s6 + $0x78] sm:$0xf]
    %v66 = vld [vmem:[%s6 + $0x7c] sm:$0xf]
    %v67 = vld [vmem:[%s6 + $0x80] sm:$0xf]
    %v68 = vld [vmem:[%s6 + $0x84] sm:$0xf]
    %v69 = vld [vmem:[%s6 + $0x88] sm:$0xf]
    %v70 = vld [vmem:[%s6 + $0x8c] sm:$0xf]
    %v71 = vld [vmem:[%s6 + $0x90] sm:$0xf]
    %v72 = vld [vmem:[%s6 + $0x94] sm:$0xf]
    %v73 = vld [vmem:[%s6 + $0x98] sm:$0xf]
    %v74 = vld [vmem:[%s6 + $0x9c] sm:$0xf]
    %v75 = vld [vmem:[%s6 + $0xa0] sm:$0xf]
    %v76 = vld [vmem:[%s6 + $0xa4] sm:$0xf]
    %v77 = vld [vmem:[%s6 + $0xa8] sm:$0xf]
    %v78 = vld [vmem:[%s6 + $0xac] sm:$0xf]
    %v79 = vld [vmem:[%s6 + $0xb0] sm:$0xf]
    %v80 = vld [vmem:[%s6 + $0xb4] sm:$0xf]
    %v81 = vld [vmem:[%s6 + $0xb8] sm:$0xf]
    %v82 = vld [vmem:[%s6 + $0xbc] sm:$0xf]
    %v83 = vld [vmem:[%s6 + $0xc0] sm:$0xf]
    %v84 = vld [vmem:[%s6 + $0xc4] sm:$0xf]
    %v85 = vld [vmem:[%s6 + $0xc8] sm:$0xf]
    %v86 = vld [vmem:[%s6 + $0xcc] sm:$0xf]
    %v87 = vld [vmem:[%s6 + $0xd0] sm:$0xf]
    %v88 = vld [vmem:[%s6 + $0xd4] sm:$0xf]
    %v89 = vld [vmem:[%s6 + $0xd8] sm:$0xf]
    %v90 = vld [vmem:[%s6 + $0xdc] sm:$0xf]
    %v91 = vld [vmem:[%s6 + $0xe0] sm:$0xf]
    %v92 = vld [vmem:[%s6 + $0xe4] sm:$0xf]
    %v93 = vld [vmem:[%s6 + $0xe8] sm:$0xf]
    %v94 = vld [vmem:[%s6 + $0xec] sm:$0xf]
    %v95 = vld [vmem:[%s6 + $0xf0] sm:$0xf]
    %v96 = vld [vmem:[%s6 + $0xf4] sm:$0xf]
    %v97 = vld [vmem:[%s6 + $0xf8] sm:$0xf]
    %v98 = vld [vmem:[%s6 + $0xfc] sm:$0xf]
    %v99 = vld [vmem:[%s6 + $0x100] sm:$0xf]
    %v100 = vld [vmem:[%s6 + $0x104] sm:$0xf]
    %v101 = vld [vmem:[%s6 + $0x108] sm:$0xf]
    %v102 = vld [vmem:[%s6 + $0x10c] sm:$0xf]
    %v103 = vld [vmem:[%s6 + $0x110] sm:$0xf]
    %v104 = vld [vmem:[%s6 + $0x114] sm:$0xf]
    %v105 = vld [vmem:[%s6 + $0x118] sm:$0xf]
    %v106 = vld [vmem:[%s6 + $0x11c] sm:$0xf]
    %v107 = vld [vmem:[%s6 + $0x120] sm:$0xf]
    %v108 = vld [vmem:[%s6 + $0x124] sm:$0xf]
    %v109 = vld [vmem:[%s6 + $0x128] sm:$0xf]
    %v110 = vld [vmem:[%s6 + $0x12c] sm:$0xf]
    %v111 = vld [vmem:[%s6 + $0x130] sm:$0xf]
    %v112 = vld [vmem:[%s6 + $0x134] sm:$0xf]
    %v113 = vld [vmem:[%s6 + $0x138] sm:$0xf]
    %v114 = vld [vmem:[%s6 + $0x13c] sm:$0xf]
    %v115 = vld [vmem:[%s6 + $0x140] sm:$0xf]
    %v116 = vld [vmem:[%s6 + $0x144] sm:$0xf]
    %v117 = vld [vmem:[%s6 + $0x148] sm:$0xf]
    %v118 = vld [vmem:[%s6 + $0x14c] sm:$0xf]
    %v119 = vld [vmem:[%s6 + $0x150] sm:$0xf]
    %v120 = vld [vmem:[%s6 + $0x154] sm:$0xf]
    %v121 = vld [vmem:[%s6 + $0x158] sm:$0xf]
    %v122 = vld [vmem:[%s6 + $0x15c] sm:$0xf]
    %v123 = vld [vmem:[%s6 + $0x160] sm:$0xf]
    %v124 = vld [vmem:[%s6 + $0x164] sm:$0xf]
    %v125 = vld [vmem:[%s6 + $0x168] sm:$0xf]
    %v126 = vld [vmem:[%s6 + $0x16c] sm:$0xf]
    %v127 = vld [vmem:[%s6 + $0x170] sm:$0xf]
    %v128 = vld [vmem:[%s6 + $0x174] sm:$0xf]
    %v129 = vld [vmem:[%s6 + $0x178] sm:$0xf]
    %v130 = vld [vmem:[%s6 + $0x17c] sm:$0xf]
    %v131 = vld [vmem:[%s6 + $0x180] sm:$0xf]
    %v132 = vld [vmem:[%s6 + $0x184] sm:$0xf]
    %v133 = vld [vmem:[%s6 + $0x188] sm:$0xf]
    %v134 = vld [vmem:[%s6 + $0x18c] sm:$0xf]
    %v135 = vld [vmem:[%s6 + $0x190] sm:$0xf]
    %v136 = vld [vmem:[%s6 + $0x194] sm:$0xf]
    %v137 = vld [vmem:[%s6 + $0x198] sm:$0xf]
    %v138 = vld [vmem:[%s6 + $0x19c] sm:$0xf]
    %v139 = vld [vmem:[%s6 + $0x1a0] sm:$0xf]
    %v140 = vld [vmem:[%s6 + $0x1a4] sm:$0xf]
    %v141 = vld [vmem:[%s6 + $0x1a8] sm:$0xf]
    %v142 = vld [vmem:[%s6 + $0x1ac] sm:$0xf]
    %v143 = vld [vmem:[%s6 + $0x1b0] sm:$0xf]
    %v144 = vld [vmem:[%s6 + $0x1b4] sm:$0xf]
    %v145 = vld [vmem:[%s6 + $0x1b8] sm:$0xf]
    %v146 = vld [vmem:[%s6 + $0x1bc] sm:$0xf]
    %v147 = vld [vmem:[%s6 + $0x1c0] sm:$0xf]
    %v148 = vld [vmem:[%s6 + $0x1c4] sm:$0xf]
    %v149 = vld [vmem:[%s6 + $0x1c8] sm:$0xf]
    %v150 = vld [vmem:[%s6 + $0x1cc] sm:$0xf]
    %v151 = vld [vmem:[%s6 + $0x1d0] sm:$0xf]
    %v152 = vld [vmem:[%s6 + $0x1d4] sm:$0xf]
    %v153 = vld [vmem:[%s6 + $0x1d8] sm:$0xf]
    %v154 = vld [vmem:[%s6 + $0x1dc] sm:$0xf]
    %v155 = vld [vmem:[%s6 + $0x1e0] sm:$0xf]
    %v156 = vld [vmem:[%s6 + $0x1e4] sm:$0xf]
    %v157 = vld [vmem:[%s6 + $0x1e8] sm:$0xf]
    %v158 = vld [vmem:[%s6 + $0x1ec] sm:$0xf]
    %v159 = vld [vmem:[%s6 + $0x1f0] sm:$0xf]
    %v160 = vld [vmem:[%s6 + $0x1f4] sm:$0xf]
    %v161 = vld [vmem:[%s6 + $0x1f8] sm:$0xf]
    %v162 = vld [vmem:[%s6 + $0x1fc] sm:$0xf]
    %v163 = vunpack.c.l.bf16 %v35
    %v164 = vunpack.c.l.bf16 %v36
    %v165 = vunpack.c.l.bf16 %v37
    %v166 = vunpack.c.l.bf16 %v38
    %v167 = vunpack.c.l.bf16 %v39
    %v168 = vunpack.c.l.bf16 %v40
    %v169 = vunpack.c.l.bf16 %v41
    %v170 = vunpack.c.l.bf16 %v42
    %v171 = vunpack.c.l.bf16 %v43
    %v172 = vunpack.c.l.bf16 %v44
    %v173 = vunpack.c.l.bf16 %v45
    %v174 = vunpack.c.l.bf16 %v46
    %v175 = vunpack.c.l.bf16 %v47
    %v176 = vunpack.c.l.bf16 %v48
    %v177 = vunpack.c.l.bf16 %v49
    %v178 = vunpack.c.l.bf16 %v50
    %v179 = vunpack.c.l.bf16 %v51
    %v180 = vunpack.c.l.bf16 %v52
    %v181 = vunpack.c.l.bf16 %v53
    %v182 = vunpack.c.l.bf16 %v54
    %v183 = vunpack.c.l.bf16 %v55
    %v184 = vunpack.c.l.bf16 %v56
    %v185 = vunpack.c.l.bf16 %v57
    %v186 = vunpack.c.l.bf16 %v58
    %v187 = vunpack.c.l.bf16 %v59
    %v188 = vunpack.c.l.bf16 %v60
    %v189 = vunpack.c.l.bf16 %v61
    %v190 = vunpack.c.l.bf16 %v62
    %v191 = vunpack.c.l.bf16 %v63
    %v192 = vunpack.c.l.bf16 %v64
    %v193 = vunpack.c.l.bf16 %v65
    %v194 = vunpack.c.l.bf16 %v66
    %v195 = vunpack.c.l.bf16 %v67
    %v196 = vunpack.c.l.bf16 %v68
    %v197 = vunpack.c.l.bf16 %v69
    %v198 = vunpack.c.l.bf16 %v70
    %v199 = vunpack.c.l.bf16 %v71
    %v200 = vunpack.c.l.bf16 %v72
    %v201 = vunpack.c.l.bf16 %v73
    %v202 = vunpack.c.l.bf16 %v74
    %v203 = vunpack.c.l.bf16 %v75
    %v204 = vunpack.c.l.bf16 %v76
    %v205 = vunpack.c.l.bf16 %v77
    %v206 = vunpack.c.l.bf16 %v78
    %v207 = vunpack.c.l.bf16 %v79
    %v208 = vunpack.c.l.bf16 %v80
    %v209 = vunpack.c.l.bf16 %v81
    %v210 = vunpack.c.l.bf16 %v82
    %v211 = vunpack.c.l.bf16 %v83
    %v212 = vunpack.c.l.bf16 %v84
    %v213 = vunpack.c.l.bf16 %v85
    %v214 = vunpack.c.l.bf16 %v86
    %v215 = vunpack.c.l.bf16 %v87
    %v216 = vunpack.c.l.bf16 %v88
    %v217 = vunpack.c.l.bf16 %v89
    %v218 = vunpack.c.l.bf16 %v90
    %v219 = vunpack.c.l.bf16 %v91
    %v220 = vunpack.c.l.bf16 %v92
    %v221 = vunpack.c.l.bf16 %v93
    %v222 = vunpack.c.l.bf16 %v94
    %v223 = vunpack.c.l.bf16 %v95
    %v224 = vunpack.c.l.bf16 %v96
    %v225 = vunpack.c.l.bf16 %v97
    %v226 = vunpack.c.l.bf16 %v98
    %v227 = vunpack.c.l.bf16 %v99
    %v228 = vunpack.c.l.bf16 %v100
    %v229 = vunpack.c.l.bf16 %v101
    %v230 = vunpack.c.l.bf16 %v102
    %v231 = vunpack.c.l.bf16 %v103
    %v232 = vunpack.c.l.bf16 %v104
    %v233 = vunpack.c.l.bf16 %v105
    %v234 = vunpack.c.l.bf16 %v106
    %v235 = vunpack.c.l.bf16 %v107
    %v236 = vunpack.c.l.bf16 %v108
    %v237 = vunpack.c.l.bf16 %v109
    %v238 = vunpack.c.l.bf16 %v110
    %v239 = vunpack.c.l.bf16 %v111
    %v240 = vunpack.c.l.bf16 %v112
    %v241 = vunpack.c.l.bf16 %v113
    %v242 = vunpack.c.l.bf16 %v114
    %v243 = vunpack.c.l.bf16 %v115
    %v244 = vunpack.c.l.bf16 %v116
    %v245 = vunpack.c.l.bf16 %v117
    %v246 = vunpack.c.l.bf16 %v118
    %v247 = vunpack.c.l.bf16 %v119
    %v248 = vunpack.c.l.bf16 %v120
    %v249 = vunpack.c.l.bf16 %v121
    %v250 = vunpack.c.l.bf16 %v122
    %v251 = vunpack.c.l.bf16 %v123
    %v252 = vunpack.c.l.bf16 %v124
    %v253 = vunpack.c.l.bf16 %v125
    %v254 = vunpack.c.l.bf16 %v126
    %v255 = vunpack.c.l.bf16 %v127
    %v256 = vunpack.c.l.bf16 %v128
    %v257 = vunpack.c.l.bf16 %v129
    %v258 = vunpack.c.l.bf16 %v130
    %v259 = vunpack.c.l.bf16 %v131
    %v260 = vunpack.c.l.bf16 %v132
    %v261 = vunpack.c.l.bf16 %v133
    %v262 = vunpack.c.l.bf16 %v134
    %v263 = vunpack.c.l.bf16 %v135
    %v264 = vunpack.c.l.bf16 %v136
    %v265 = vunpack.c.l.bf16 %v137
    %v266 = vunpack.c.l.bf16 %v138
    %v267 = vunpack.c.l.bf16 %v139
    %v268 = vunpack.c.l.bf16 %v140
    %v269 = vunpack.c.l.bf16 %v141
    %v270 = vunpack.c.l.bf16 %v142
    %v271 = vunpack.c.l.bf16 %v143
    %v272 = vunpack.c.l.bf16 %v144
    %v273 = vunpack.c.l.bf16 %v145
    %v274 = vunpack.c.l.bf16 %v146
    %v275 = vunpack.c.l.bf16 %v147
    %v276 = vunpack.c.l.bf16 %v148
    %v277 = vunpack.c.l.bf16 %v149
    %v278 = vunpack.c.l.bf16 %v150
    %v279 = vunpack.c.l.bf16 %v151
    %v280 = vunpack.c.l.bf16 %v152
    %v281 = vunpack.c.l.bf16 %v153
    %v282 = vunpack.c.l.bf16 %v154
    %v283 = vunpack.c.l.bf16 %v155
    %v284 = vunpack.c.l.bf16 %v156
    %v285 = vunpack.c.l.bf16 %v157
    %v286 = vunpack.c.l.bf16 %v158
    %v287 = vunpack.c.l.bf16 %v159
    %v288 = vunpack.c.l.bf16 %v160
    %v289 = vunpack.c.l.bf16 %v161
    %v290 = vunpack.c.l.bf16 %v162
    %v291 = vld [vmem:[%s1] sm:$0xff]
    %v292 = vld [vmem:[%s1 + $0x8] sm:$0xff]
    %v293 = vld [vmem:[%s1 + $0x10] sm:$0xff]
    %v294 = vld [vmem:[%s1 + $0x18] sm:$0xff]
    %v295 = vld [vmem:[%s1 + $0x20] sm:$0xff]
    %v296 = vld [vmem:[%s1 + $0x28] sm:$0xff]
    %v297 = vld [vmem:[%s1 + $0x30] sm:$0xff]
    %v298 = vld [vmem:[%s1 + $0x38] sm:$0xff]
    %v299 = vld [vmem:[%s1 + $0x40] sm:$0xff]
    %v300 = vld [vmem:[%s1 + $0x48] sm:$0xff]
    %v301 = vld [vmem:[%s1 + $0x50] sm:$0xff]
    %v302 = vld [vmem:[%s1 + $0x58] sm:$0xff]
    %v303 = vld [vmem:[%s1 + $0x60] sm:$0xff]
    %v304 = vld [vmem:[%s1 + $0x68] sm:$0xff]
    %v305 = vld [vmem:[%s1 + $0x70] sm:$0xff]
    %v306 = vld [vmem:[%s1 + $0x78] sm:$0xff]
    %v307 = vmul.f32 %v291, %v163
    %v308 = vmul.f32 %v292, %v164
    %v309 = vmul.f32 %v293, %v165
    %v310 = vmul.f32 %v294, %v166
    %v311 = vmul.f32 %v295, %v167
    %v312 = vmul.f32 %v296, %v168
    %v313 = vmul.f32 %v297, %v169
    %v314 = vmul.f32 %v298, %v170
    %v315 = vmul.f32 %v299, %v171
    %v316 = vmul.f32 %v300, %v172
    %v317 = vmul.f32 %v301, %v173
    %v318 = vmul.f32 %v302, %v174
    %v319 = vmul.f32 %v303, %v175
    %v320 = vmul.f32 %v304, %v176
    %v321 = vmul.f32 %v305, %v177
    %v322 = vmul.f32 %v306, %v178
    %v323 = vmul.f32 %v291, %v179
    %v324 = vmul.f32 %v292, %v180
    %v325 = vmul.f32 %v293, %v181
    %v326 = vmul.f32 %v294, %v182
    %v327 = vmul.f32 %v295, %v183
    %v328 = vmul.f32 %v296, %v184
    %v329 = vmul.f32 %v297, %v185
    %v330 = vmul.f32 %v298, %v186
    %v331 = vmul.f32 %v299, %v187
    %v332 = vmul.f32 %v300, %v188
    %v333 = vmul.f32 %v301, %v189
    %v334 = vmul.f32 %v302, %v190
    %v335 = vmul.f32 %v303, %v191
    %v336 = vmul.f32 %v304, %v192
    %v337 = vmul.f32 %v305, %v193
    %v338 = vmul.f32 %v306, %v194
    %v339 = vmul.f32 %v291, %v195
    %v340 = vmul.f32 %v292, %v196
    %v341 = vmul.f32 %v293, %v197
    %v342 = vmul.f32 %v294, %v198
    %v343 = vmul.f32 %v295, %v199
    %v344 = vmul.f32 %v296, %v200
    %v345 = vmul.f32 %v297, %v201
    %v346 = vmul.f32 %v298, %v202
    %v347 = vmul.f32 %v299, %v203
    %v348 = vmul.f32 %v300, %v204
    %v349 = vmul.f32 %v301, %v205
    %v350 = vmul.f32 %v302, %v206
    %v351 = vmul.f32 %v303, %v207
    %v352 = vmul.f32 %v304, %v208
    %v353 = vmul.f32 %v305, %v209
    %v354 = vmul.f32 %v306, %v210
    %v355 = vmul.f32 %v291, %v211
    %v356 = vmul.f32 %v292, %v212
    %v357 = vmul.f32 %v293, %v213
    %v358 = vmul.f32 %v294, %v214
    %v359 = vmul.f32 %v295, %v215
    %v360 = vmul.f32 %v296, %v216
    %v361 = vmul.f32 %v297, %v217
    %v362 = vmul.f32 %v298, %v218
    %v363 = vmul.f32 %v299, %v219
    %v364 = vmul.f32 %v300, %v220
    %v365 = vmul.f32 %v301, %v221
    %v366 = vmul.f32 %v302, %v222
    %v367 = vmul.f32 %v303, %v223
    %v368 = vmul.f32 %v304, %v224
    %v369 = vmul.f32 %v305, %v225
    %v370 = vmul.f32 %v306, %v226
    %v371 = vmul.f32 %v291, %v227
    %v372 = vmul.f32 %v292, %v228
    %v373 = vmul.f32 %v293, %v229
    %v374 = vmul.f32 %v294, %v230
    %v375 = vmul.f32 %v295, %v231
    %v376 = vmul.f32 %v296, %v232
    %v377 = vmul.f32 %v297, %v233
    %v378 = vmul.f32 %v298, %v234
    %v379 = vmul.f32 %v299, %v235
    %v380 = vmul.f32 %v300, %v236
    %v381 = vmul.f32 %v301, %v237
    %v382 = vmul.f32 %v302, %v238
    %v383 = vmul.f32 %v303, %v239
    %v384 = vmul.f32 %v304, %v240
    %v385 = vmul.f32 %v305, %v241
    %v386 = vmul.f32 %v306, %v242
    %v387 = vmul.f32 %v291, %v243
    %v388 = vmul.f32 %v292, %v244
    %v389 = vmul.f32 %v293, %v245
    %v390 = vmul.f32 %v294, %v246
    %v391 = vmul.f32 %v295, %v247
    %v392 = vmul.f32 %v296, %v248
    %v393 = vmul.f32 %v297, %v249
    %v394 = vmul.f32 %v298, %v250
    %v395 = vmul.f32 %v299, %v251
    %v396 = vmul.f32 %v300, %v252
    %v397 = vmul.f32 %v301, %v253
    %v398 = vmul.f32 %v302, %v254
    %v399 = vmul.f32 %v303, %v255
    %v400 = vmul.f32 %v304, %v256
    %v401 = vmul.f32 %v305, %v257
    %v402 = vmul.f32 %v306, %v258
    %v403 = vmul.f32 %v291, %v259
    %v404 = vmul.f32 %v292, %v260
    %v405 = vmul.f32 %v293, %v261
    %v406 = vmul.f32 %v294, %v262
    %v407 = vmul.f32 %v295, %v263
    %v408 = vmul.f32 %v296, %v264
    %v409 = vmul.f32 %v297, %v265
    %v410 = vmul.f32 %v298, %v266
    %v411 = vmul.f32 %v299, %v267
    %v412 = vmul.f32 %v300, %v268
    %v413 = vmul.f32 %v301, %v269
    %v414 = vmul.f32 %v302, %v270
    %v415 = vmul.f32 %v303, %v271
    %v416 = vmul.f32 %v304, %v272
    %v417 = vmul.f32 %v305, %v273
    %v418 = vmul.f32 %v306, %v274
    %v419 = vmul.f32 %v291, %v275
    %v420 = vmul.f32 %v292, %v276
    %v421 = vmul.f32 %v293, %v277
    %v422 = vmul.f32 %v294, %v278
    %v423 = vmul.f32 %v295, %v279
    %v424 = vmul.f32 %v296, %v280
    %v425 = vmul.f32 %v297, %v281
    %v426 = vmul.f32 %v298, %v282
    %v427 = vmul.f32 %v299, %v283
    %v428 = vmul.f32 %v300, %v284
    %v429 = vmul.f32 %v301, %v285
    %v430 = vmul.f32 %v302, %v286
    %v431 = vmul.f32 %v303, %v287
    %v432 = vmul.f32 %v304, %v288
    %v433 = vmul.f32 %v305, %v289
    %v434 = vmul.f32 %v306, %v290
    %v435 = vld [vmem:[%s5] sm:$0x1]
    %v436 = vld [vmem:[%s5 + $0x1] sm:$0x1]
    %v437 = vld [vmem:[%s5 + $0x2] sm:$0x1]
    %v438 = vld [vmem:[%s5 + $0x3] sm:$0x1]
    %v439 = vld [vmem:[%s5 + $0x4] sm:$0x1]
    %v440 = vld [vmem:[%s5 + $0x5] sm:$0x1]
    %v441 = vld [vmem:[%s5 + $0x6] sm:$0x1]
    %v442 = vld [vmem:[%s5 + $0x7] sm:$0x1]
    %v451 = vlaneseq
    %v452 = vshrl.u32 %v451, 7
    %v453 = vsub.s32 0, %v452
    %v454 = vrot.slane %v435, %v453
    %v455 = vlaneseq
    %v456 = vshrl.u32 %v455, 7
    %v457 = vsub.s32 0, %v456
    %v458 = vrot.slane %v436, %v457
    %v459 = vlaneseq
    %v460 = vshrl.u32 %v459, 7
    %v461 = vsub.s32 0, %v460
    %v462 = vrot.slane %v437, %v461
    %v463 = vlaneseq
    %v464 = vshrl.u32 %v463, 7
    %v465 = vsub.s32 0, %v464
    %v466 = vrot.slane %v438, %v465
    %v467 = vlaneseq
    %v468 = vshrl.u32 %v467, 7
    %v469 = vsub.s32 0, %v468
    %v470 = vrot.slane %v439, %v469
    %v471 = vlaneseq
    %v472 = vshrl.u32 %v471, 7
    %v473 = vsub.s32 0, %v472
    %v474 = vrot.slane %v440, %v473
    %v475 = vlaneseq
    %v476 = vshrl.u32 %v475, 7
    %v477 = vsub.s32 0, %v476
    %v478 = vrot.slane %v441, %v477
    %v479 = vlaneseq
    %v480 = vshrl.u32 %v479, 7
    %v481 = vsub.s32 0, %v480
    %v482 = vrot.slane %v442, %v481
    %v491 = vmul.f32 %v307, %v454
    %v492 = vmul.f32 %v308, %v454
    %v493 = vmul.f32 %v309, %v454
    %v494 = vmul.f32 %v310, %v454
    %v495 = vmul.f32 %v311, %v454
    %v496 = vmul.f32 %v312, %v454
    %v497 = vmul.f32 %v313, %v454
    %v498 = vmul.f32 %v314, %v454
    %v499 = vmul.f32 %v315, %v454
    %v500 = vmul.f32 %v316, %v454
    %v501 = vmul.f32 %v317, %v454
    %v502 = vmul.f32 %v318, %v454
    %v503 = vmul.f32 %v319, %v454
    %v504 = vmul.f32 %v320, %v454
    %v505 = vmul.f32 %v321, %v454
    %v506 = vmul.f32 %v322, %v454
    %v507 = vmul.f32 %v323, %v458
    %v508 = vmul.f32 %v324, %v458
    %v509 = vmul.f32 %v325, %v458
    %v510 = vmul.f32 %v326, %v458
    %v511 = vmul.f32 %v327, %v458
    %v512 = vmul.f32 %v328, %v458
    %v513 = vmul.f32 %v329, %v458
    %v514 = vmul.f32 %v330, %v458
    %v515 = vmul.f32 %v331, %v458
    %v516 = vmul.f32 %v332, %v458
    %v517 = vmul.f32 %v333, %v458
    %v518 = vmul.f32 %v334, %v458
    %v519 = vmul.f32 %v335, %v458
    %v520 = vmul.f32 %v336, %v458
    %v521 = vmul.f32 %v337, %v458
    %v522 = vmul.f32 %v338, %v458
    %v523 = vmul.f32 %v339, %v462
    %v524 = vmul.f32 %v340, %v462
    %v525 = vmul.f32 %v341, %v462
    %v526 = vmul.f32 %v342, %v462
    %v527 = vmul.f32 %v343, %v462
    %v528 = vmul.f32 %v344, %v462
    %v529 = vmul.f32 %v345, %v462
    %v530 = vmul.f32 %v346, %v462
    %v531 = vmul.f32 %v347, %v462
    %v532 = vmul.f32 %v348, %v462
    %v533 = vmul.f32 %v349, %v462
    %v534 = vmul.f32 %v350, %v462
    %v535 = vmul.f32 %v351, %v462
    %v536 = vmul.f32 %v352, %v462
    %v537 = vmul.f32 %v353, %v462
    %v538 = vmul.f32 %v354, %v462
    %v539 = vmul.f32 %v355, %v466
    %v540 = vmul.f32 %v356, %v466
    %v541 = vmul.f32 %v357, %v466
    %v542 = vmul.f32 %v358, %v466
    %v543 = vmul.f32 %v359, %v466
    %v544 = vmul.f32 %v360, %v466
    %v545 = vmul.f32 %v361, %v466
    %v546 = vmul.f32 %v362, %v466
    %v547 = vmul.f32 %v363, %v466
    %v548 = vmul.f32 %v364, %v466
    %v549 = vmul.f32 %v365, %v466
    %v550 = vmul.f32 %v366, %v466
    %v551 = vmul.f32 %v367, %v466
    %v552 = vmul.f32 %v368, %v466
    %v553 = vmul.f32 %v369, %v466
    %v554 = vmul.f32 %v370, %v466
    %v555 = vmul.f32 %v371, %v470
    %v556 = vmul.f32 %v372, %v470
    %v557 = vmul.f32 %v373, %v470
    %v558 = vmul.f32 %v374, %v470
    %v559 = vmul.f32 %v375, %v470
    %v560 = vmul.f32 %v376, %v470
    %v561 = vmul.f32 %v377, %v470
    %v562 = vmul.f32 %v378, %v470
    %v563 = vmul.f32 %v379, %v470
    %v564 = vmul.f32 %v380, %v470
    %v565 = vmul.f32 %v381, %v470
    %v566 = vmul.f32 %v382, %v470
    %v567 = vmul.f32 %v383, %v470
    %v568 = vmul.f32 %v384, %v470
    %v569 = vmul.f32 %v385, %v470
    %v570 = vmul.f32 %v386, %v470
    %v571 = vmul.f32 %v387, %v474
    %v572 = vmul.f32 %v388, %v474
    %v573 = vmul.f32 %v389, %v474
    %v574 = vmul.f32 %v390, %v474
    %v575 = vmul.f32 %v391, %v474
    %v576 = vmul.f32 %v392, %v474
    %v577 = vmul.f32 %v393, %v474
    %v578 = vmul.f32 %v394, %v474
    %v579 = vmul.f32 %v395, %v474
    %v580 = vmul.f32 %v396, %v474
    %v581 = vmul.f32 %v397, %v474
    %v582 = vmul.f32 %v398, %v474
    %v583 = vmul.f32 %v399, %v474
    %v584 = vmul.f32 %v400, %v474
    %v585 = vmul.f32 %v401, %v474
    %v586 = vmul.f32 %v402, %v474
    %v587 = vmul.f32 %v403, %v478
    %v588 = vmul.f32 %v404, %v478
    %v589 = vmul.f32 %v405, %v478
    %v590 = vmul.f32 %v406, %v478
    %v591 = vmul.f32 %v407, %v478
    %v592 = vmul.f32 %v408, %v478
    %v593 = vmul.f32 %v409, %v478
    %v594 = vmul.f32 %v410, %v478
    %v595 = vmul.f32 %v411, %v478
    %v596 = vmul.f32 %v412, %v478
    %v597 = vmul.f32 %v413, %v478
    %v598 = vmul.f32 %v414, %v478
    %v599 = vmul.f32 %v415, %v478
    %v600 = vmul.f32 %v416, %v478
    %v601 = vmul.f32 %v417, %v478
    %v602 = vmul.f32 %v418, %v478
    %v603 = vmul.f32 %v419, %v482
    %v604 = vmul.f32 %v420, %v482
    %v605 = vmul.f32 %v421, %v482
    %v606 = vmul.f32 %v422, %v482
    %v607 = vmul.f32 %v423, %v482
    %v608 = vmul.f32 %v424, %v482
    %v609 = vmul.f32 %v425, %v482
    %v610 = vmul.f32 %v426, %v482
    %v611 = vmul.f32 %v427, %v482
    %v612 = vmul.f32 %v428, %v482
    %v613 = vmul.f32 %v429, %v482
    %v614 = vmul.f32 %v430, %v482
    %v615 = vmul.f32 %v431, %v482
    %v616 = vmul.f32 %v432, %v482
    %v617 = vmul.f32 %v433, %v482
    %v618 = vmul.f32 %v434, %v482
    %vm619 = vcmask 261120
    %v620 = vsel %vm619, %v491, 0.0
    %621 = vadd.xlane.f32.xlu0 %v620
    %v622 = vpop.xlane.xlu0 %621
    %v623 = vsel %vm619, %v492, 0.0
    %624 = vadd.xlane.f32.xlu0 %v623
    %v625 = vpop.xlane.xlu0 %624
    %v626 = vsel %vm619, %v493, 0.0
    %627 = vadd.xlane.f32.xlu0 %v626
    %v628 = vpop.xlane.xlu0 %627
    %v629 = vsel %vm619, %v494, 0.0
    %630 = vadd.xlane.f32.xlu0 %v629
    %v631 = vpop.xlane.xlu0 %630
    %v632 = vsel %vm619, %v495, 0.0
    %633 = vadd.xlane.f32.xlu0 %v632
    %v634 = vpop.xlane.xlu0 %633
    %v635 = vsel %vm619, %v496, 0.0
    %636 = vadd.xlane.f32.xlu0 %v635
    %v637 = vpop.xlane.xlu0 %636
    %v638 = vsel %vm619, %v497, 0.0
    %639 = vadd.xlane.f32.xlu0 %v638
    %v640 = vpop.xlane.xlu0 %639
    %v641 = vsel %vm619, %v498, 0.0
    %642 = vadd.xlane.f32.xlu0 %v641
    %v643 = vpop.xlane.xlu0 %642
    %v644 = vsel %vm619, %v499, 0.0
    %645 = vadd.xlane.f32.xlu0 %v644
    %v646 = vpop.xlane.xlu0 %645
    %v647 = vsel %vm619, %v500, 0.0
    %648 = vadd.xlane.f32.xlu0 %v647
    %v649 = vpop.xlane.xlu0 %648
    %v650 = vsel %vm619, %v501, 0.0
    %651 = vadd.xlane.f32.xlu0 %v650
    %v652 = vpop.xlane.xlu0 %651
    %v653 = vsel %vm619, %v502, 0.0
    %654 = vadd.xlane.f32.xlu0 %v653
    %v655 = vpop.xlane.xlu0 %654
    %v656 = vsel %vm619, %v503, 0.0
    %657 = vadd.xlane.f32.xlu0 %v656
    %v658 = vpop.xlane.xlu0 %657
    %v659 = vsel %vm619, %v504, 0.0
    %660 = vadd.xlane.f32.xlu0 %v659
    %v661 = vpop.xlane.xlu0 %660
    %v662 = vsel %vm619, %v505, 0.0
    %663 = vadd.xlane.f32.xlu0 %v662
    %v664 = vpop.xlane.xlu0 %663
    %v665 = vsel %vm619, %v506, 0.0
    %666 = vadd.xlane.f32.xlu0 %v665
    %v667 = vpop.xlane.xlu0 %666
    %v668 = vsel %vm619, %v507, 0.0
    %669 = vadd.xlane.f32.xlu0 %v668
    %v670 = vpop.xlane.xlu0 %669
    %v671 = vsel %vm619, %v508, 0.0
    %672 = vadd.xlane.f32.xlu0 %v671
    %v673 = vpop.xlane.xlu0 %672
    %v674 = vsel %vm619, %v509, 0.0
    %675 = vadd.xlane.f32.xlu0 %v674
    %v676 = vpop.xlane.xlu0 %675
    %v677 = vsel %vm619, %v510, 0.0
    %678 = vadd.xlane.f32.xlu0 %v677
    %v679 = vpop.xlane.xlu0 %678
    %v680 = vsel %vm619, %v511, 0.0
    %681 = vadd.xlane.f32.xlu0 %v680
    %v682 = vpop.xlane.xlu0 %681
    %v683 = vsel %vm619, %v512, 0.0
    %684 = vadd.xlane.f32.xlu0 %v683
    %v685 = vpop.xlane.xlu0 %684
    %v686 = vsel %vm619, %v513, 0.0
    %687 = vadd.xlane.f32.xlu0 %v686
    %v688 = vpop.xlane.xlu0 %687
    %v689 = vsel %vm619, %v514, 0.0
    %690 = vadd.xlane.f32.xlu0 %v689
    %v691 = vpop.xlane.xlu0 %690
    %v692 = vsel %vm619, %v515, 0.0
    %693 = vadd.xlane.f32.xlu0 %v692
    %v694 = vpop.xlane.xlu0 %693
    %v695 = vsel %vm619, %v516, 0.0
    %696 = vadd.xlane.f32.xlu0 %v695
    %v697 = vpop.xlane.xlu0 %696
    %v698 = vsel %vm619, %v517, 0.0
    %699 = vadd.xlane.f32.xlu0 %v698
    %v700 = vpop.xlane.xlu0 %699
    %v701 = vsel %vm619, %v518, 0.0
    %702 = vadd.xlane.f32.xlu0 %v701
    %v703 = vpop.xlane.xlu0 %702
    %v704 = vsel %vm619, %v519, 0.0
    %705 = vadd.xlane.f32.xlu0 %v704
    %v706 = vpop.xlane.xlu0 %705
    %v707 = vsel %vm619, %v520, 0.0
    %708 = vadd.xlane.f32.xlu0 %v707
    %v709 = vpop.xlane.xlu0 %708
    %v710 = vsel %vm619, %v521, 0.0
    %711 = vadd.xlane.f32.xlu0 %v710
    %v712 = vpop.xlane.xlu0 %711
    %v713 = vsel %vm619, %v522, 0.0
    %714 = vadd.xlane.f32.xlu0 %v713
    %v715 = vpop.xlane.xlu0 %714
    %v716 = vsel %vm619, %v523, 0.0
    %717 = vadd.xlane.f32.xlu0 %v716
    %v718 = vpop.xlane.xlu0 %717
    %v719 = vsel %vm619, %v524, 0.0
    %720 = vadd.xlane.f32.xlu0 %v719
    %v721 = vpop.xlane.xlu0 %720
    %v722 = vsel %vm619, %v525, 0.0
    %723 = vadd.xlane.f32.xlu0 %v722
    %v724 = vpop.xlane.xlu0 %723
    %v725 = vsel %vm619, %v526, 0.0
    %726 = vadd.xlane.f32.xlu0 %v725
    %v727 = vpop.xlane.xlu0 %726
    %v728 = vsel %vm619, %v527, 0.0
    %729 = vadd.xlane.f32.xlu0 %v728
    %v730 = vpop.xlane.xlu0 %729
    %v731 = vsel %vm619, %v528, 0.0
    %732 = vadd.xlane.f32.xlu0 %v731
    %v733 = vpop.xlane.xlu0 %732
    %v734 = vsel %vm619, %v529, 0.0
    %735 = vadd.xlane.f32.xlu0 %v734
    %v736 = vpop.xlane.xlu0 %735
    %v737 = vsel %vm619, %v530, 0.0
    %738 = vadd.xlane.f32.xlu0 %v737
    %v739 = vpop.xlane.xlu0 %738
    %v740 = vsel %vm619, %v531, 0.0
    %741 = vadd.xlane.f32.xlu0 %v740
    %v742 = vpop.xlane.xlu0 %741
    %v743 = vsel %vm619, %v532, 0.0
    %744 = vadd.xlane.f32.xlu0 %v743
    %v745 = vpop.xlane.xlu0 %744
    %v746 = vsel %vm619, %v533, 0.0
    %747 = vadd.xlane.f32.xlu0 %v746
    %v748 = vpop.xlane.xlu0 %747
    %v749 = vsel %vm619, %v534, 0.0
    %750 = vadd.xlane.f32.xlu0 %v749
    %v751 = vpop.xlane.xlu0 %750
    %v752 = vsel %vm619, %v535, 0.0
    %753 = vadd.xlane.f32.xlu0 %v752
    %v754 = vpop.xlane.xlu0 %753
    %v755 = vsel %vm619, %v536, 0.0
    %756 = vadd.xlane.f32.xlu0 %v755
    %v757 = vpop.xlane.xlu0 %756
    %v758 = vsel %vm619, %v537, 0.0
    %759 = vadd.xlane.f32.xlu0 %v758
    %v760 = vpop.xlane.xlu0 %759
    %v761 = vsel %vm619, %v538, 0.0
    %762 = vadd.xlane.f32.xlu0 %v761
    %v763 = vpop.xlane.xlu0 %762
    %v764 = vsel %vm619, %v539, 0.0
    %765 = vadd.xlane.f32.xlu0 %v764
    %v766 = vpop.xlane.xlu0 %765
    %v767 = vsel %vm619, %v540, 0.0
    %768 = vadd.xlane.f32.xlu0 %v767
    %v769 = vpop.xlane.xlu0 %768
    %v770 = vsel %vm619, %v541, 0.0
    %771 = vadd.xlane.f32.xlu0 %v770
    %v772 = vpop.xlane.xlu0 %771
    %v773 = vsel %vm619, %v542, 0.0
    %774 = vadd.xlane.f32.xlu0 %v773
    %v775 = vpop.xlane.xlu0 %774
    %v776 = vsel %vm619, %v543, 0.0
    %777 = vadd.xlane.f32.xlu0 %v776
    %v778 = vpop.xlane.xlu0 %777
    %v779 = vsel %vm619, %v544, 0.0
    %780 = vadd.xlane.f32.xlu0 %v779
    %v781 = vpop.xlane.xlu0 %780
    %v782 = vsel %vm619, %v545, 0.0
    %783 = vadd.xlane.f32.xlu0 %v782
    %v784 = vpop.xlane.xlu0 %783
    %v785 = vsel %vm619, %v546, 0.0
    %786 = vadd.xlane.f32.xlu0 %v785
    %v787 = vpop.xlane.xlu0 %786
    %v788 = vsel %vm619, %v547, 0.0
    %789 = vadd.xlane.f32.xlu0 %v788
    %v790 = vpop.xlane.xlu0 %789
    %v791 = vsel %vm619, %v548, 0.0
    %792 = vadd.xlane.f32.xlu0 %v791
    %v793 = vpop.xlane.xlu0 %792
    %v794 = vsel %vm619, %v549, 0.0
    %795 = vadd.xlane.f32.xlu0 %v794
    %v796 = vpop.xlane.xlu0 %795
    %v797 = vsel %vm619, %v550, 0.0
    %798 = vadd.xlane.f32.xlu0 %v797
    %v799 = vpop.xlane.xlu0 %798
    %v800 = vsel %vm619, %v551, 0.0
    %801 = vadd.xlane.f32.xlu0 %v800
    %v802 = vpop.xlane.xlu0 %801
    %v803 = vsel %vm619, %v552, 0.0
    %804 = vadd.xlane.f32.xlu0 %v803
    %v805 = vpop.xlane.xlu0 %804
    %v806 = vsel %vm619, %v553, 0.0
    %807 = vadd.xlane.f32.xlu0 %v806
    %v808 = vpop.xlane.xlu0 %807
    %v809 = vsel %vm619, %v554, 0.0
    %810 = vadd.xlane.f32.xlu0 %v809
    %v811 = vpop.xlane.xlu0 %810
    %v812 = vsel %vm619, %v555, 0.0
    %813 = vadd.xlane.f32.xlu0 %v812
    %v814 = vpop.xlane.xlu0 %813
    %v815 = vsel %vm619, %v556, 0.0
    %816 = vadd.xlane.f32.xlu0 %v815
    %v817 = vpop.xlane.xlu0 %816
    %v818 = vsel %vm619, %v557, 0.0
    %819 = vadd.xlane.f32.xlu0 %v818
    %v820 = vpop.xlane.xlu0 %819
    %v821 = vsel %vm619, %v558, 0.0
    %822 = vadd.xlane.f32.xlu0 %v821
    %v823 = vpop.xlane.xlu0 %822
    %v824 = vsel %vm619, %v559, 0.0
    %825 = vadd.xlane.f32.xlu0 %v824
    %v826 = vpop.xlane.xlu0 %825
    %v827 = vsel %vm619, %v560, 0.0
    %828 = vadd.xlane.f32.xlu0 %v827
    %v829 = vpop.xlane.xlu0 %828
    %v830 = vsel %vm619, %v561, 0.0
    %831 = vadd.xlane.f32.xlu0 %v830
    %v832 = vpop.xlane.xlu0 %831
    %v833 = vsel %vm619, %v562, 0.0
    %834 = vadd.xlane.f32.xlu0 %v833
    %v835 = vpop.xlane.xlu0 %834
    %v836 = vsel %vm619, %v563, 0.0
    %837 = vadd.xlane.f32.xlu0 %v836
    %v838 = vpop.xlane.xlu0 %837
    %v839 = vsel %vm619, %v564, 0.0
    %840 = vadd.xlane.f32.xlu0 %v839
    %v841 = vpop.xlane.xlu0 %840
    %v842 = vsel %vm619, %v565, 0.0
    %843 = vadd.xlane.f32.xlu0 %v842
    %v844 = vpop.xlane.xlu0 %843
    %v845 = vsel %vm619, %v566, 0.0
    %846 = vadd.xlane.f32.xlu0 %v845
    %v847 = vpop.xlane.xlu0 %846
    %v848 = vsel %vm619, %v567, 0.0
    %849 = vadd.xlane.f32.xlu0 %v848
    %v850 = vpop.xlane.xlu0 %849
    %v851 = vsel %vm619, %v568, 0.0
    %852 = vadd.xlane.f32.xlu0 %v851
    %v853 = vpop.xlane.xlu0 %852
    %v854 = vsel %vm619, %v569, 0.0
    %855 = vadd.xlane.f32.xlu0 %v854
    %v856 = vpop.xlane.xlu0 %855
    %v857 = vsel %vm619, %v570, 0.0
    %858 = vadd.xlane.f32.xlu0 %v857
    %v859 = vpop.xlane.xlu0 %858
    %v860 = vsel %vm619, %v571, 0.0
    %861 = vadd.xlane.f32.xlu0 %v860
    %v862 = vpop.xlane.xlu0 %861
    %v863 = vsel %vm619, %v572, 0.0
    %864 = vadd.xlane.f32.xlu0 %v863
    %v865 = vpop.xlane.xlu0 %864
    %v866 = vsel %vm619, %v573, 0.0
    %867 = vadd.xlane.f32.xlu0 %v866
    %v868 = vpop.xlane.xlu0 %867
    %v869 = vsel %vm619, %v574, 0.0
    %870 = vadd.xlane.f32.xlu0 %v869
    %v871 = vpop.xlane.xlu0 %870
    %v872 = vsel %vm619, %v575, 0.0
    %873 = vadd.xlane.f32.xlu0 %v872
    %v874 = vpop.xlane.xlu0 %873
    %v875 = vsel %vm619, %v576, 0.0
    %876 = vadd.xlane.f32.xlu0 %v875
    %v877 = vpop.xlane.xlu0 %876
    %v878 = vsel %vm619, %v577, 0.0
    %879 = vadd.xlane.f32.xlu0 %v878
    %v880 = vpop.xlane.xlu0 %879
    %v881 = vsel %vm619, %v578, 0.0
    %882 = vadd.xlane.f32.xlu0 %v881
    %v883 = vpop.xlane.xlu0 %882
    %v884 = vsel %vm619, %v579, 0.0
    %885 = vadd.xlane.f32.xlu0 %v884
    %v886 = vpop.xlane.xlu0 %885
    %v887 = vsel %vm619, %v580, 0.0
    %888 = vadd.xlane.f32.xlu0 %v887
    %v889 = vpop.xlane.xlu0 %888
    %v890 = vsel %vm619, %v581, 0.0
    %891 = vadd.xlane.f32.xlu0 %v890
    %v892 = vpop.xlane.xlu0 %891
    %v893 = vsel %vm619, %v582, 0.0
    %894 = vadd.xlane.f32.xlu0 %v893
    %v895 = vpop.xlane.xlu0 %894
    %v896 = vsel %vm619, %v583, 0.0
    %897 = vadd.xlane.f32.xlu0 %v896
    %v898 = vpop.xlane.xlu0 %897
    %v899 = vsel %vm619, %v584, 0.0
    %900 = vadd.xlane.f32.xlu0 %v899
    %v901 = vpop.xlane.xlu0 %900
    %v902 = vsel %vm619, %v585, 0.0
    %903 = vadd.xlane.f32.xlu0 %v902
    %v904 = vpop.xlane.xlu0 %903
    %v905 = vsel %vm619, %v586, 0.0
    %906 = vadd.xlane.f32.xlu0 %v905
    %v907 = vpop.xlane.xlu0 %906
    %v908 = vsel %vm619, %v587, 0.0
    %909 = vadd.xlane.f32.xlu0 %v908
    %v910 = vpop.xlane.xlu0 %909
    %v911 = vsel %vm619, %v588, 0.0
    %912 = vadd.xlane.f32.xlu0 %v911
    %v913 = vpop.xlane.xlu0 %912
    %v914 = vsel %vm619, %v589, 0.0
    %915 = vadd.xlane.f32.xlu0 %v914
    %v916 = vpop.xlane.xlu0 %915
    %v917 = vsel %vm619, %v590, 0.0
    %918 = vadd.xlane.f32.xlu0 %v917
    %v919 = vpop.xlane.xlu0 %918
    %v920 = vsel %vm619, %v591, 0.0
    %921 = vadd.xlane.f32.xlu0 %v920
    %v922 = vpop.xlane.xlu0 %921
    %v923 = vsel %vm619, %v592, 0.0
    %924 = vadd.xlane.f32.xlu0 %v923
    %v925 = vpop.xlane.xlu0 %924
    %v926 = vsel %vm619, %v593, 0.0
    %927 = vadd.xlane.f32.xlu0 %v926
    %v928 = vpop.xlane.xlu0 %927
    %v929 = vsel %vm619, %v594, 0.0
    %930 = vadd.xlane.f32.xlu0 %v929
    %v931 = vpop.xlane.xlu0 %930
    %v932 = vsel %vm619, %v595, 0.0
    %933 = vadd.xlane.f32.xlu0 %v932
    %v934 = vpop.xlane.xlu0 %933
    %v935 = vsel %vm619, %v596, 0.0
    %936 = vadd.xlane.f32.xlu0 %v935
    %v937 = vpop.xlane.xlu0 %936
    %v938 = vsel %vm619, %v597, 0.0
    %939 = vadd.xlane.f32.xlu0 %v938
    %v940 = vpop.xlane.xlu0 %939
    %v941 = vsel %vm619, %v598, 0.0
    %942 = vadd.xlane.f32.xlu0 %v941
    %v943 = vpop.xlane.xlu0 %942
    %v944 = vsel %vm619, %v599, 0.0
    %945 = vadd.xlane.f32.xlu0 %v944
    %v946 = vpop.xlane.xlu0 %945
    %v947 = vsel %vm619, %v600, 0.0
    %948 = vadd.xlane.f32.xlu0 %v947
    %v949 = vpop.xlane.xlu0 %948
    %v950 = vsel %vm619, %v601, 0.0
    %951 = vadd.xlane.f32.xlu0 %v950
    %v952 = vpop.xlane.xlu0 %951
    %v953 = vsel %vm619, %v602, 0.0
    %954 = vadd.xlane.f32.xlu0 %v953
    %v955 = vpop.xlane.xlu0 %954
    %v956 = vsel %vm619, %v603, 0.0
    %957 = vadd.xlane.f32.xlu0 %v956
    %v958 = vpop.xlane.xlu0 %957
    %v959 = vsel %vm619, %v604, 0.0
    %960 = vadd.xlane.f32.xlu0 %v959
    %v961 = vpop.xlane.xlu0 %960
    %v962 = vsel %vm619, %v605, 0.0
    %963 = vadd.xlane.f32.xlu0 %v962
    %v964 = vpop.xlane.xlu0 %963
    %v965 = vsel %vm619, %v606, 0.0
    %966 = vadd.xlane.f32.xlu0 %v965
    %v967 = vpop.xlane.xlu0 %966
    %v968 = vsel %vm619, %v607, 0.0
    %969 = vadd.xlane.f32.xlu0 %v968
    %v970 = vpop.xlane.xlu0 %969
    %v971 = vsel %vm619, %v608, 0.0
    %972 = vadd.xlane.f32.xlu0 %v971
    %v973 = vpop.xlane.xlu0 %972
    %v974 = vsel %vm619, %v609, 0.0
    %975 = vadd.xlane.f32.xlu0 %v974
    %v976 = vpop.xlane.xlu0 %975
    %v977 = vsel %vm619, %v610, 0.0
    %978 = vadd.xlane.f32.xlu0 %v977
    %v979 = vpop.xlane.xlu0 %978
    %v980 = vsel %vm619, %v611, 0.0
    %981 = vadd.xlane.f32.xlu0 %v980
    %v982 = vpop.xlane.xlu0 %981
    %v983 = vsel %vm619, %v612, 0.0
    %984 = vadd.xlane.f32.xlu0 %v983
    %v985 = vpop.xlane.xlu0 %984
    %v986 = vsel %vm619, %v613, 0.0
    %987 = vadd.xlane.f32.xlu0 %v986
    %v988 = vpop.xlane.xlu0 %987
    %v989 = vsel %vm619, %v614, 0.0
    %990 = vadd.xlane.f32.xlu0 %v989
    %v991 = vpop.xlane.xlu0 %990
    %v992 = vsel %vm619, %v615, 0.0
    %993 = vadd.xlane.f32.xlu0 %v992
    %v994 = vpop.xlane.xlu0 %993
    %v995 = vsel %vm619, %v616, 0.0
    %996 = vadd.xlane.f32.xlu0 %v995
    %v997 = vpop.xlane.xlu0 %996
    %v998 = vsel %vm619, %v617, 0.0
    %999 = vadd.xlane.f32.xlu0 %v998
    %v1000 = vpop.xlane.xlu0 %999
    %v1001 = vsel %vm619, %v618, 0.0
    %1002 = vadd.xlane.f32.xlu0 %v1001
    %v1003 = vpop.xlane.xlu0 %1002
    %v1004 = vld [vmem:[%s2] sm:$0x1]
    %v1005 = vld [vmem:[%s3] sm:$0x1]
    %v1006 = vld [vmem:[%s7] sm:$0xff]
    %v1008 = vlaneseq
    %v1009 = vshrl.u32 %v1008, 7
    %v1010 = vsub.s32 0, %v1009
    %v1011 = vrot.slane %v1005, %v1010
    %v1013 = vmul.f32 %v1011, %v1006
    %v1015 = vlaneseq
    %v1016 = vshrl.u32 %v1015, 7
    %v1017 = vsub.s32 0, %v1016
    %v1018 = vrot.slane %v1004, %v1017
    %v1020 = vadd.f32 %v1018, %v1013
    %v1149 = vlaneseq
    %v1150 = vand.u32 %v1149, 127
    %v1151 = vlaneseq
    %v1152 = vshrl.u32 %v1151, 7
    %v1153 = vsub.s32 %v1150, %v1152
    %v1154 = vrot.slane %v622, %v1153
    %v1155 = vadd.s32 %v1150, 4294967288
    %v1156 = vlaneseq
    %v1157 = vshrl.u32 %v1156, 7
    %v1158 = vsub.s32 %v1155, %v1157
    %v1159 = vrot.slane %v625, %v1158
    %vm1160 = vcmask 130112
    %v1161 = vsel %vm1160, %v1159, %v1154
    %v1162 = vadd.s32 %v1150, 4294967280
    %v1163 = vlaneseq
    %v1164 = vshrl.u32 %v1163, 7
    %v1165 = vsub.s32 %v1162, %v1164
    %v1166 = vrot.slane %v628, %v1165
    %vm1167 = vcmask 195712
    %v1168 = vsel %vm1167, %v1166, %v1161
    %v1169 = vadd.s32 %v1150, 4294967272
    %v1170 = vlaneseq
    %v1171 = vshrl.u32 %v1170, 7
    %v1172 = vsub.s32 %v1169, %v1171
    %v1173 = vrot.slane %v631, %v1172
    %vm1174 = vcmask 261312
    %v1175 = vsel %vm1174, %v1173, %v1168
    %v1176 = vadd.s32 %v1150, 4294967264
    %v1177 = vlaneseq
    %v1178 = vshrl.u32 %v1177, 7
    %v1179 = vsub.s32 %v1176, %v1178
    %v1180 = vrot.slane %v634, %v1179
    %vm1181 = vcmask 326912
    %v1182 = vsel %vm1181, %v1180, %v1175
    %v1183 = vadd.s32 %v1150, 4294967256
    %v1184 = vlaneseq
    %v1185 = vshrl.u32 %v1184, 7
    %v1186 = vsub.s32 %v1183, %v1185
    %v1187 = vrot.slane %v637, %v1186
    %vm1188 = vcmask 392512
    %v1189 = vsel %vm1188, %v1187, %v1182
    %v1190 = vadd.s32 %v1150, 4294967248
    %v1191 = vlaneseq
    %v1192 = vshrl.u32 %v1191, 7
    %v1193 = vsub.s32 %v1190, %v1192
    %v1194 = vrot.slane %v640, %v1193
    %vm1195 = vcmask 458112
    %v1196 = vsel %vm1195, %v1194, %v1189
    %v1197 = vadd.s32 %v1150, 4294967240
    %v1198 = vlaneseq
    %v1199 = vshrl.u32 %v1198, 7
    %v1200 = vsub.s32 %v1197, %v1199
    %v1201 = vrot.slane %v643, %v1200
    %vm1202 = vcmask 523712
    %v1203 = vsel %vm1202, %v1201, %v1196
    %v1204 = vadd.s32 %v1150, 4294967232
    %v1205 = vlaneseq
    %v1206 = vshrl.u32 %v1205, 7
    %v1207 = vsub.s32 %v1204, %v1206
    %v1208 = vrot.slane %v646, %v1207
    %vm1209 = vcmask 589312
    %v1210 = vsel %vm1209, %v1208, %v1203
    %v1211 = vadd.s32 %v1150, 4294967224
    %v1212 = vlaneseq
    %v1213 = vshrl.u32 %v1212, 7
    %v1214 = vsub.s32 %v1211, %v1213
    %v1215 = vrot.slane %v649, %v1214
    %vm1216 = vcmask 654912
    %v1217 = vsel %vm1216, %v1215, %v1210
    %v1218 = vadd.s32 %v1150, 4294967216
    %v1219 = vlaneseq
    %v1220 = vshrl.u32 %v1219, 7
    %v1221 = vsub.s32 %v1218, %v1220
    %v1222 = vrot.slane %v652, %v1221
    %vm1223 = vcmask 720512
    %v1224 = vsel %vm1223, %v1222, %v1217
    %v1225 = vadd.s32 %v1150, 4294967208
    %v1226 = vlaneseq
    %v1227 = vshrl.u32 %v1226, 7
    %v1228 = vsub.s32 %v1225, %v1227
    %v1229 = vrot.slane %v655, %v1228
    %vm1230 = vcmask 786112
    %v1231 = vsel %vm1230, %v1229, %v1224
    %v1232 = vadd.s32 %v1150, 4294967200
    %v1233 = vlaneseq
    %v1234 = vshrl.u32 %v1233, 7
    %v1235 = vsub.s32 %v1232, %v1234
    %v1236 = vrot.slane %v658, %v1235
    %vm1237 = vcmask 851712
    %v1238 = vsel %vm1237, %v1236, %v1231
    %v1239 = vadd.s32 %v1150, 4294967192
    %v1240 = vlaneseq
    %v1241 = vshrl.u32 %v1240, 7
    %v1242 = vsub.s32 %v1239, %v1241
    %v1243 = vrot.slane %v661, %v1242
    %vm1244 = vcmask 917312
    %v1245 = vsel %vm1244, %v1243, %v1238
    %v1246 = vadd.s32 %v1150, 4294967184
    %v1247 = vlaneseq
    %v1248 = vshrl.u32 %v1247, 7
    %v1249 = vsub.s32 %v1246, %v1248
    %v1250 = vrot.slane %v664, %v1249
    %vm1251 = vcmask 982912
    %v1252 = vsel %vm1251, %v1250, %v1245
    %v1253 = vadd.s32 %v1150, 4294967176
    %v1254 = vlaneseq
    %v1255 = vshrl.u32 %v1254, 7
    %v1256 = vsub.s32 %v1253, %v1255
    %v1257 = vrot.slane %v667, %v1256
    %vm1258 = vcmask 1048512
    %v1259 = vsel %vm1258, %v1257, %v1252
    %v1260 = vlaneseq
    %v1261 = vshrl.u32 %v1260, 7
    %v1262 = vsub.s32 %v1150, %v1261
    %v1263 = vrot.slane %v670, %v1262
    %v1264 = vlaneseq
    %v1265 = vshrl.u32 %v1264, 7
    %v1266 = vsub.s32 %v1155, %v1265
    %v1267 = vrot.slane %v673, %v1266
    %v1268 = vsel %vm1160, %v1267, %v1263
    %v1269 = vlaneseq
    %v1270 = vshrl.u32 %v1269, 7
    %v1271 = vsub.s32 %v1162, %v1270
    %v1272 = vrot.slane %v676, %v1271
    %v1273 = vsel %vm1167, %v1272, %v1268
    %v1274 = vlaneseq
    %v1275 = vshrl.u32 %v1274, 7
    %v1276 = vsub.s32 %v1169, %v1275
    %v1277 = vrot.slane %v679, %v1276
    %v1278 = vsel %vm1174, %v1277, %v1273
    %v1279 = vlaneseq
    %v1280 = vshrl.u32 %v1279, 7
    %v1281 = vsub.s32 %v1176, %v1280
    %v1282 = vrot.slane %v682, %v1281
    %v1283 = vsel %vm1181, %v1282, %v1278
    %v1284 = vlaneseq
    %v1285 = vshrl.u32 %v1284, 7
    %v1286 = vsub.s32 %v1183, %v1285
    %v1287 = vrot.slane %v685, %v1286
    %v1288 = vsel %vm1188, %v1287, %v1283
    %v1289 = vlaneseq
    %v1290 = vshrl.u32 %v1289, 7
    %v1291 = vsub.s32 %v1190, %v1290
    %v1292 = vrot.slane %v688, %v1291
    %v1293 = vsel %vm1195, %v1292, %v1288
    %v1294 = vlaneseq
    %v1295 = vshrl.u32 %v1294, 7
    %v1296 = vsub.s32 %v1197, %v1295
    %v1297 = vrot.slane %v691, %v1296
    %v1298 = vsel %vm1202, %v1297, %v1293
    %v1299 = vlaneseq
    %v1300 = vshrl.u32 %v1299, 7
    %v1301 = vsub.s32 %v1204, %v1300
    %v1302 = vrot.slane %v694, %v1301
    %v1303 = vsel %vm1209, %v1302, %v1298
    %v1304 = vlaneseq
    %v1305 = vshrl.u32 %v1304, 7
    %v1306 = vsub.s32 %v1211, %v1305
    %v1307 = vrot.slane %v697, %v1306
    %v1308 = vsel %vm1216, %v1307, %v1303
    %v1309 = vlaneseq
    %v1310 = vshrl.u32 %v1309, 7
    %v1311 = vsub.s32 %v1218, %v1310
    %v1312 = vrot.slane %v700, %v1311
    %v1313 = vsel %vm1223, %v1312, %v1308
    %v1314 = vlaneseq
    %v1315 = vshrl.u32 %v1314, 7
    %v1316 = vsub.s32 %v1225, %v1315
    %v1317 = vrot.slane %v703, %v1316
    %v1318 = vsel %vm1230, %v1317, %v1313
    %v1319 = vlaneseq
    %v1320 = vshrl.u32 %v1319, 7
    %v1321 = vsub.s32 %v1232, %v1320
    %v1322 = vrot.slane %v706, %v1321
    %v1323 = vsel %vm1237, %v1322, %v1318
    %v1324 = vlaneseq
    %v1325 = vshrl.u32 %v1324, 7
    %v1326 = vsub.s32 %v1239, %v1325
    %v1327 = vrot.slane %v709, %v1326
    %v1328 = vsel %vm1244, %v1327, %v1323
    %v1329 = vlaneseq
    %v1330 = vshrl.u32 %v1329, 7
    %v1331 = vsub.s32 %v1246, %v1330
    %v1332 = vrot.slane %v712, %v1331
    %v1333 = vsel %vm1251, %v1332, %v1328
    %v1334 = vlaneseq
    %v1335 = vshrl.u32 %v1334, 7
    %v1336 = vsub.s32 %v1253, %v1335
    %v1337 = vrot.slane %v715, %v1336
    %v1338 = vsel %vm1258, %v1337, %v1333
    %v1339 = vlaneseq
    %v1340 = vshrl.u32 %v1339, 7
    %v1341 = vsub.s32 %v1150, %v1340
    %v1342 = vrot.slane %v718, %v1341
    %v1343 = vlaneseq
    %v1344 = vshrl.u32 %v1343, 7
    %v1345 = vsub.s32 %v1155, %v1344
    %v1346 = vrot.slane %v721, %v1345
    %v1347 = vsel %vm1160, %v1346, %v1342
    %v1348 = vlaneseq
    %v1349 = vshrl.u32 %v1348, 7
    %v1350 = vsub.s32 %v1162, %v1349
    %v1351 = vrot.slane %v724, %v1350
    %v1352 = vsel %vm1167, %v1351, %v1347
    %v1353 = vlaneseq
    %v1354 = vshrl.u32 %v1353, 7
    %v1355 = vsub.s32 %v1169, %v1354
    %v1356 = vrot.slane %v727, %v1355
    %v1357 = vsel %vm1174, %v1356, %v1352
    %v1358 = vlaneseq
    %v1359 = vshrl.u32 %v1358, 7
    %v1360 = vsub.s32 %v1176, %v1359
    %v1361 = vrot.slane %v730, %v1360
    %v1362 = vsel %vm1181, %v1361, %v1357
    %v1363 = vlaneseq
    %v1364 = vshrl.u32 %v1363, 7
    %v1365 = vsub.s32 %v1183, %v1364
    %v1366 = vrot.slane %v733, %v1365
    %v1367 = vsel %vm1188, %v1366, %v1362
    %v1368 = vlaneseq
    %v1369 = vshrl.u32 %v1368, 7
    %v1370 = vsub.s32 %v1190, %v1369
    %v1371 = vrot.slane %v736, %v1370
    %v1372 = vsel %vm1195, %v1371, %v1367
    %v1373 = vlaneseq
    %v1374 = vshrl.u32 %v1373, 7
    %v1375 = vsub.s32 %v1197, %v1374
    %v1376 = vrot.slane %v739, %v1375
    %v1377 = vsel %vm1202, %v1376, %v1372
    %v1378 = vlaneseq
    %v1379 = vshrl.u32 %v1378, 7
    %v1380 = vsub.s32 %v1204, %v1379
    %v1381 = vrot.slane %v742, %v1380
    %v1382 = vsel %vm1209, %v1381, %v1377
    %v1383 = vlaneseq
    %v1384 = vshrl.u32 %v1383, 7
    %v1385 = vsub.s32 %v1211, %v1384
    %v1386 = vrot.slane %v745, %v1385
    %v1387 = vsel %vm1216, %v1386, %v1382
    %v1388 = vlaneseq
    %v1389 = vshrl.u32 %v1388, 7
    %v1390 = vsub.s32 %v1218, %v1389
    %v1391 = vrot.slane %v748, %v1390
    %v1392 = vsel %vm1223, %v1391, %v1387
    %v1393 = vlaneseq
    %v1394 = vshrl.u32 %v1393, 7
    %v1395 = vsub.s32 %v1225, %v1394
    %v1396 = vrot.slane %v751, %v1395
    %v1397 = vsel %vm1230, %v1396, %v1392
    %v1398 = vlaneseq
    %v1399 = vshrl.u32 %v1398, 7
    %v1400 = vsub.s32 %v1232, %v1399
    %v1401 = vrot.slane %v754, %v1400
    %v1402 = vsel %vm1237, %v1401, %v1397
    %v1403 = vlaneseq
    %v1404 = vshrl.u32 %v1403, 7
    %v1405 = vsub.s32 %v1239, %v1404
    %v1406 = vrot.slane %v757, %v1405
    %v1407 = vsel %vm1244, %v1406, %v1402
    %v1408 = vlaneseq
    %v1409 = vshrl.u32 %v1408, 7
    %v1410 = vsub.s32 %v1246, %v1409
    %v1411 = vrot.slane %v760, %v1410
    %v1412 = vsel %vm1251, %v1411, %v1407
    %v1413 = vlaneseq
    %v1414 = vshrl.u32 %v1413, 7
    %v1415 = vsub.s32 %v1253, %v1414
    %v1416 = vrot.slane %v763, %v1415
    %v1417 = vsel %vm1258, %v1416, %v1412
    %v1418 = vlaneseq
    %v1419 = vshrl.u32 %v1418, 7
    %v1420 = vsub.s32 %v1150, %v1419
    %v1421 = vrot.slane %v766, %v1420
    %v1422 = vlaneseq
    %v1423 = vshrl.u32 %v1422, 7
    %v1424 = vsub.s32 %v1155, %v1423
    %v1425 = vrot.slane %v769, %v1424
    %v1426 = vsel %vm1160, %v1425, %v1421
    %v1427 = vlaneseq
    %v1428 = vshrl.u32 %v1427, 7
    %v1429 = vsub.s32 %v1162, %v1428
    %v1430 = vrot.slane %v772, %v1429
    %v1431 = vsel %vm1167, %v1430, %v1426
    %v1432 = vlaneseq
    %v1433 = vshrl.u32 %v1432, 7
    %v1434 = vsub.s32 %v1169, %v1433
    %v1435 = vrot.slane %v775, %v1434
    %v1436 = vsel %vm1174, %v1435, %v1431
    %v1437 = vlaneseq
    %v1438 = vshrl.u32 %v1437, 7
    %v1439 = vsub.s32 %v1176, %v1438
    %v1440 = vrot.slane %v778, %v1439
    %v1441 = vsel %vm1181, %v1440, %v1436
    %v1442 = vlaneseq
    %v1443 = vshrl.u32 %v1442, 7
    %v1444 = vsub.s32 %v1183, %v1443
    %v1445 = vrot.slane %v781, %v1444
    %v1446 = vsel %vm1188, %v1445, %v1441
    %v1447 = vlaneseq
    %v1448 = vshrl.u32 %v1447, 7
    %v1449 = vsub.s32 %v1190, %v1448
    %v1450 = vrot.slane %v784, %v1449
    %v1451 = vsel %vm1195, %v1450, %v1446
    %v1452 = vlaneseq
    %v1453 = vshrl.u32 %v1452, 7
    %v1454 = vsub.s32 %v1197, %v1453
    %v1455 = vrot.slane %v787, %v1454
    %v1456 = vsel %vm1202, %v1455, %v1451
    %v1457 = vlaneseq
    %v1458 = vshrl.u32 %v1457, 7
    %v1459 = vsub.s32 %v1204, %v1458
    %v1460 = vrot.slane %v790, %v1459
    %v1461 = vsel %vm1209, %v1460, %v1456
    %v1462 = vlaneseq
    %v1463 = vshrl.u32 %v1462, 7
    %v1464 = vsub.s32 %v1211, %v1463
    %v1465 = vrot.slane %v793, %v1464
    %v1466 = vsel %vm1216, %v1465, %v1461
    %v1467 = vlaneseq
    %v1468 = vshrl.u32 %v1467, 7
    %v1469 = vsub.s32 %v1218, %v1468
    %v1470 = vrot.slane %v796, %v1469
    %v1471 = vsel %vm1223, %v1470, %v1466
    %v1472 = vlaneseq
    %v1473 = vshrl.u32 %v1472, 7
    %v1474 = vsub.s32 %v1225, %v1473
    %v1475 = vrot.slane %v799, %v1474
    %v1476 = vsel %vm1230, %v1475, %v1471
    %v1477 = vlaneseq
    %v1478 = vshrl.u32 %v1477, 7
    %v1479 = vsub.s32 %v1232, %v1478
    %v1480 = vrot.slane %v802, %v1479
    %v1481 = vsel %vm1237, %v1480, %v1476
    %v1482 = vlaneseq
    %v1483 = vshrl.u32 %v1482, 7
    %v1484 = vsub.s32 %v1239, %v1483
    %v1485 = vrot.slane %v805, %v1484
    %v1486 = vsel %vm1244, %v1485, %v1481
    %v1487 = vlaneseq
    %v1488 = vshrl.u32 %v1487, 7
    %v1489 = vsub.s32 %v1246, %v1488
    %v1490 = vrot.slane %v808, %v1489
    %v1491 = vsel %vm1251, %v1490, %v1486
    %v1492 = vlaneseq
    %v1493 = vshrl.u32 %v1492, 7
    %v1494 = vsub.s32 %v1253, %v1493
    %v1495 = vrot.slane %v811, %v1494
    %v1496 = vsel %vm1258, %v1495, %v1491
    %v1497 = vlaneseq
    %v1498 = vshrl.u32 %v1497, 7
    %v1499 = vsub.s32 %v1150, %v1498
    %v1500 = vrot.slane %v814, %v1499
    %v1501 = vlaneseq
    %v1502 = vshrl.u32 %v1501, 7
    %v1503 = vsub.s32 %v1155, %v1502
    %v1504 = vrot.slane %v817, %v1503
    %v1505 = vsel %vm1160, %v1504, %v1500
    %v1506 = vlaneseq
    %v1507 = vshrl.u32 %v1506, 7
    %v1508 = vsub.s32 %v1162, %v1507
    %v1509 = vrot.slane %v820, %v1508
    %v1510 = vsel %vm1167, %v1509, %v1505
    %v1511 = vlaneseq
    %v1512 = vshrl.u32 %v1511, 7
    %v1513 = vsub.s32 %v1169, %v1512
    %v1514 = vrot.slane %v823, %v1513
    %v1515 = vsel %vm1174, %v1514, %v1510
    %v1516 = vlaneseq
    %v1517 = vshrl.u32 %v1516, 7
    %v1518 = vsub.s32 %v1176, %v1517
    %v1519 = vrot.slane %v826, %v1518
    %v1520 = vsel %vm1181, %v1519, %v1515
    %v1521 = vlaneseq
    %v1522 = vshrl.u32 %v1521, 7
    %v1523 = vsub.s32 %v1183, %v1522
    %v1524 = vrot.slane %v829, %v1523
    %v1525 = vsel %vm1188, %v1524, %v1520
    %v1526 = vlaneseq
    %v1527 = vshrl.u32 %v1526, 7
    %v1528 = vsub.s32 %v1190, %v1527
    %v1529 = vrot.slane %v832, %v1528
    %v1530 = vsel %vm1195, %v1529, %v1525
    %v1531 = vlaneseq
    %v1532 = vshrl.u32 %v1531, 7
    %v1533 = vsub.s32 %v1197, %v1532
    %v1534 = vrot.slane %v835, %v1533
    %v1535 = vsel %vm1202, %v1534, %v1530
    %v1536 = vlaneseq
    %v1537 = vshrl.u32 %v1536, 7
    %v1538 = vsub.s32 %v1204, %v1537
    %v1539 = vrot.slane %v838, %v1538
    %v1540 = vsel %vm1209, %v1539, %v1535
    %v1541 = vlaneseq
    %v1542 = vshrl.u32 %v1541, 7
    %v1543 = vsub.s32 %v1211, %v1542
    %v1544 = vrot.slane %v841, %v1543
    %v1545 = vsel %vm1216, %v1544, %v1540
    %v1546 = vlaneseq
    %v1547 = vshrl.u32 %v1546, 7
    %v1548 = vsub.s32 %v1218, %v1547
    %v1549 = vrot.slane %v844, %v1548
    %v1550 = vsel %vm1223, %v1549, %v1545
    %v1551 = vlaneseq
    %v1552 = vshrl.u32 %v1551, 7
    %v1553 = vsub.s32 %v1225, %v1552
    %v1554 = vrot.slane %v847, %v1553
    %v1555 = vsel %vm1230, %v1554, %v1550
    %v1556 = vlaneseq
    %v1557 = vshrl.u32 %v1556, 7
    %v1558 = vsub.s32 %v1232, %v1557
    %v1559 = vrot.slane %v850, %v1558
    %v1560 = vsel %vm1237, %v1559, %v1555
    %v1561 = vlaneseq
    %v1562 = vshrl.u32 %v1561, 7
    %v1563 = vsub.s32 %v1239, %v1562
    %v1564 = vrot.slane %v853, %v1563
    %v1565 = vsel %vm1244, %v1564, %v1560
    %v1566 = vlaneseq
    %v1567 = vshrl.u32 %v1566, 7
    %v1568 = vsub.s32 %v1246, %v1567
    %v1569 = vrot.slane %v856, %v1568
    %v1570 = vsel %vm1251, %v1569, %v1565
    %v1571 = vlaneseq
    %v1572 = vshrl.u32 %v1571, 7
    %v1573 = vsub.s32 %v1253, %v1572
    %v1574 = vrot.slane %v859, %v1573
    %v1575 = vsel %vm1258, %v1574, %v1570
    %v1576 = vlaneseq
    %v1577 = vshrl.u32 %v1576, 7
    %v1578 = vsub.s32 %v1150, %v1577
    %v1579 = vrot.slane %v862, %v1578
    %v1580 = vlaneseq
    %v1581 = vshrl.u32 %v1580, 7
    %v1582 = vsub.s32 %v1155, %v1581
    %v1583 = vrot.slane %v865, %v1582
    %v1584 = vsel %vm1160, %v1583, %v1579
    %v1585 = vlaneseq
    %v1586 = vshrl.u32 %v1585, 7
    %v1587 = vsub.s32 %v1162, %v1586
    %v1588 = vrot.slane %v868, %v1587
    %v1589 = vsel %vm1167, %v1588, %v1584
    %v1590 = vlaneseq
    %v1591 = vshrl.u32 %v1590, 7
    %v1592 = vsub.s32 %v1169, %v1591
    %v1593 = vrot.slane %v871, %v1592
    %v1594 = vsel %vm1174, %v1593, %v1589
    %v1595 = vlaneseq
    %v1596 = vshrl.u32 %v1595, 7
    %v1597 = vsub.s32 %v1176, %v1596
    %v1598 = vrot.slane %v874, %v1597
    %v1599 = vsel %vm1181, %v1598, %v1594
    %v1600 = vlaneseq
    %v1601 = vshrl.u32 %v1600, 7
    %v1602 = vsub.s32 %v1183, %v1601
    %v1603 = vrot.slane %v877, %v1602
    %v1604 = vsel %vm1188, %v1603, %v1599
    %v1605 = vlaneseq
    %v1606 = vshrl.u32 %v1605, 7
    %v1607 = vsub.s32 %v1190, %v1606
    %v1608 = vrot.slane %v880, %v1607
    %v1609 = vsel %vm1195, %v1608, %v1604
    %v1610 = vlaneseq
    %v1611 = vshrl.u32 %v1610, 7
    %v1612 = vsub.s32 %v1197, %v1611
    %v1613 = vrot.slane %v883, %v1612
    %v1614 = vsel %vm1202, %v1613, %v1609
    %v1615 = vlaneseq
    %v1616 = vshrl.u32 %v1615, 7
    %v1617 = vsub.s32 %v1204, %v1616
    %v1618 = vrot.slane %v886, %v1617
    %v1619 = vsel %vm1209, %v1618, %v1614
    %v1620 = vlaneseq
    %v1621 = vshrl.u32 %v1620, 7
    %v1622 = vsub.s32 %v1211, %v1621
    %v1623 = vrot.slane %v889, %v1622
    %v1624 = vsel %vm1216, %v1623, %v1619
    %v1625 = vlaneseq
    %v1626 = vshrl.u32 %v1625, 7
    %v1627 = vsub.s32 %v1218, %v1626
    %v1628 = vrot.slane %v892, %v1627
    %v1629 = vsel %vm1223, %v1628, %v1624
    %v1630 = vlaneseq
    %v1631 = vshrl.u32 %v1630, 7
    %v1632 = vsub.s32 %v1225, %v1631
    %v1633 = vrot.slane %v895, %v1632
    %v1634 = vsel %vm1230, %v1633, %v1629
    %v1635 = vlaneseq
    %v1636 = vshrl.u32 %v1635, 7
    %v1637 = vsub.s32 %v1232, %v1636
    %v1638 = vrot.slane %v898, %v1637
    %v1639 = vsel %vm1237, %v1638, %v1634
    %v1640 = vlaneseq
    %v1641 = vshrl.u32 %v1640, 7
    %v1642 = vsub.s32 %v1239, %v1641
    %v1643 = vrot.slane %v901, %v1642
    %v1644 = vsel %vm1244, %v1643, %v1639
    %v1645 = vlaneseq
    %v1646 = vshrl.u32 %v1645, 7
    %v1647 = vsub.s32 %v1246, %v1646
    %v1648 = vrot.slane %v904, %v1647
    %v1649 = vsel %vm1251, %v1648, %v1644
    %v1650 = vlaneseq
    %v1651 = vshrl.u32 %v1650, 7
    %v1652 = vsub.s32 %v1253, %v1651
    %v1653 = vrot.slane %v907, %v1652
    %v1654 = vsel %vm1258, %v1653, %v1649
    %v1655 = vlaneseq
    %v1656 = vshrl.u32 %v1655, 7
    %v1657 = vsub.s32 %v1150, %v1656
    %v1658 = vrot.slane %v910, %v1657
    %v1659 = vlaneseq
    %v1660 = vshrl.u32 %v1659, 7
    %v1661 = vsub.s32 %v1155, %v1660
    %v1662 = vrot.slane %v913, %v1661
    %v1663 = vsel %vm1160, %v1662, %v1658
    %v1664 = vlaneseq
    %v1665 = vshrl.u32 %v1664, 7
    %v1666 = vsub.s32 %v1162, %v1665
    %v1667 = vrot.slane %v916, %v1666
    %v1668 = vsel %vm1167, %v1667, %v1663
    %v1669 = vlaneseq
    %v1670 = vshrl.u32 %v1669, 7
    %v1671 = vsub.s32 %v1169, %v1670
    %v1672 = vrot.slane %v919, %v1671
    %v1673 = vsel %vm1174, %v1672, %v1668
    %v1674 = vlaneseq
    %v1675 = vshrl.u32 %v1674, 7
    %v1676 = vsub.s32 %v1176, %v1675
    %v1677 = vrot.slane %v922, %v1676
    %v1678 = vsel %vm1181, %v1677, %v1673
    %v1679 = vlaneseq
    %v1680 = vshrl.u32 %v1679, 7
    %v1681 = vsub.s32 %v1183, %v1680
    %v1682 = vrot.slane %v925, %v1681
    %v1683 = vsel %vm1188, %v1682, %v1678
    %v1684 = vlaneseq
    %v1685 = vshrl.u32 %v1684, 7
    %v1686 = vsub.s32 %v1190, %v1685
    %v1687 = vrot.slane %v928, %v1686
    %v1688 = vsel %vm1195, %v1687, %v1683
    %v1689 = vlaneseq
    %v1690 = vshrl.u32 %v1689, 7
    %v1691 = vsub.s32 %v1197, %v1690
    %v1692 = vrot.slane %v931, %v1691
    %v1693 = vsel %vm1202, %v1692, %v1688
    %v1694 = vlaneseq
    %v1695 = vshrl.u32 %v1694, 7
    %v1696 = vsub.s32 %v1204, %v1695
    %v1697 = vrot.slane %v934, %v1696
    %v1698 = vsel %vm1209, %v1697, %v1693
    %v1699 = vlaneseq
    %v1700 = vshrl.u32 %v1699, 7
    %v1701 = vsub.s32 %v1211, %v1700
    %v1702 = vrot.slane %v937, %v1701
    %v1703 = vsel %vm1216, %v1702, %v1698
    %v1704 = vlaneseq
    %v1705 = vshrl.u32 %v1704, 7
    %v1706 = vsub.s32 %v1218, %v1705
    %v1707 = vrot.slane %v940, %v1706
    %v1708 = vsel %vm1223, %v1707, %v1703
    %v1709 = vlaneseq
    %v1710 = vshrl.u32 %v1709, 7
    %v1711 = vsub.s32 %v1225, %v1710
    %v1712 = vrot.slane %v943, %v1711
    %v1713 = vsel %vm1230, %v1712, %v1708
    %v1714 = vlaneseq
    %v1715 = vshrl.u32 %v1714, 7
    %v1716 = vsub.s32 %v1232, %v1715
    %v1717 = vrot.slane %v946, %v1716
    %v1718 = vsel %vm1237, %v1717, %v1713
    %v1719 = vlaneseq
    %v1720 = vshrl.u32 %v1719, 7
    %v1721 = vsub.s32 %v1239, %v1720
    %v1722 = vrot.slane %v949, %v1721
    %v1723 = vsel %vm1244, %v1722, %v1718
    %v1724 = vlaneseq
    %v1725 = vshrl.u32 %v1724, 7
    %v1726 = vsub.s32 %v1246, %v1725
    %v1727 = vrot.slane %v952, %v1726
    %v1728 = vsel %vm1251, %v1727, %v1723
    %v1729 = vlaneseq
    %v1730 = vshrl.u32 %v1729, 7
    %v1731 = vsub.s32 %v1253, %v1730
    %v1732 = vrot.slane %v955, %v1731
    %v1733 = vsel %vm1258, %v1732, %v1728
    %v1734 = vlaneseq
    %v1735 = vshrl.u32 %v1734, 7
    %v1736 = vsub.s32 %v1150, %v1735
    %v1737 = vrot.slane %v958, %v1736
    %v1738 = vlaneseq
    %v1739 = vshrl.u32 %v1738, 7
    %v1740 = vsub.s32 %v1155, %v1739
    %v1741 = vrot.slane %v961, %v1740
    %v1742 = vsel %vm1160, %v1741, %v1737
    %v1743 = vlaneseq
    %v1744 = vshrl.u32 %v1743, 7
    %v1745 = vsub.s32 %v1162, %v1744
    %v1746 = vrot.slane %v964, %v1745
    %v1747 = vsel %vm1167, %v1746, %v1742
    %v1748 = vlaneseq
    %v1749 = vshrl.u32 %v1748, 7
    %v1750 = vsub.s32 %v1169, %v1749
    %v1751 = vrot.slane %v967, %v1750
    %v1752 = vsel %vm1174, %v1751, %v1747
    %v1753 = vlaneseq
    %v1754 = vshrl.u32 %v1753, 7
    %v1755 = vsub.s32 %v1176, %v1754
    %v1756 = vrot.slane %v970, %v1755
    %v1757 = vsel %vm1181, %v1756, %v1752
    %v1758 = vlaneseq
    %v1759 = vshrl.u32 %v1758, 7
    %v1760 = vsub.s32 %v1183, %v1759
    %v1761 = vrot.slane %v973, %v1760
    %v1762 = vsel %vm1188, %v1761, %v1757
    %v1763 = vlaneseq
    %v1764 = vshrl.u32 %v1763, 7
    %v1765 = vsub.s32 %v1190, %v1764
    %v1766 = vrot.slane %v976, %v1765
    %v1767 = vsel %vm1195, %v1766, %v1762
    %v1768 = vlaneseq
    %v1769 = vshrl.u32 %v1768, 7
    %v1770 = vsub.s32 %v1197, %v1769
    %v1771 = vrot.slane %v979, %v1770
    %v1772 = vsel %vm1202, %v1771, %v1767
    %v1773 = vlaneseq
    %v1774 = vshrl.u32 %v1773, 7
    %v1775 = vsub.s32 %v1204, %v1774
    %v1776 = vrot.slane %v982, %v1775
    %v1777 = vsel %vm1209, %v1776, %v1772
    %v1778 = vlaneseq
    %v1779 = vshrl.u32 %v1778, 7
    %v1780 = vsub.s32 %v1211, %v1779
    %v1781 = vrot.slane %v985, %v1780
    %v1782 = vsel %vm1216, %v1781, %v1777
    %v1783 = vlaneseq
    %v1784 = vshrl.u32 %v1783, 7
    %v1785 = vsub.s32 %v1218, %v1784
    %v1786 = vrot.slane %v988, %v1785
    %v1787 = vsel %vm1223, %v1786, %v1782
    %v1788 = vlaneseq
    %v1789 = vshrl.u32 %v1788, 7
    %v1790 = vsub.s32 %v1225, %v1789
    %v1791 = vrot.slane %v991, %v1790
    %v1792 = vsel %vm1230, %v1791, %v1787
    %v1793 = vlaneseq
    %v1794 = vshrl.u32 %v1793, 7
    %v1795 = vsub.s32 %v1232, %v1794
    %v1796 = vrot.slane %v994, %v1795
    %v1797 = vsel %vm1237, %v1796, %v1792
    %v1798 = vlaneseq
    %v1799 = vshrl.u32 %v1798, 7
    %v1800 = vsub.s32 %v1239, %v1799
    %v1801 = vrot.slane %v997, %v1800
    %v1802 = vsel %vm1244, %v1801, %v1797
    %v1803 = vlaneseq
    %v1804 = vshrl.u32 %v1803, 7
    %v1805 = vsub.s32 %v1246, %v1804
    %v1806 = vrot.slane %v1000, %v1805
    %v1807 = vsel %vm1251, %v1806, %v1802
    %v1808 = vlaneseq
    %v1809 = vshrl.u32 %v1808, 7
    %v1810 = vsub.s32 %v1253, %v1809
    %v1811 = vrot.slane %v1003, %v1810
    %v1812 = vsel %vm1258, %v1811, %v1807
    %vm1813 = vcmask 1041409
    %v1814 = vsel %vm1813, %v1338, %v1259
    %vm1815 = vcmask 1042434
    %v1816 = vsel %vm1815, %v1417, %v1814
    %vm1817 = vcmask 1043459
    %v1818 = vsel %vm1817, %v1496, %v1816
    %vm1819 = vcmask 1044484
    %v1820 = vsel %vm1819, %v1575, %v1818
    %vm1821 = vcmask 1045509
    %v1822 = vsel %vm1821, %v1654, %v1820
    %vm1823 = vcmask 1046534
    %v1824 = vsel %vm1823, %v1733, %v1822
    %vm1825 = vcmask 1047559
    %v1826 = vsel %vm1825, %v1812, %v1824
    %v1829 = vsel %vm619, %v30, 0
    %1831 = vmatprep.subr.mxu0 0.0
    %1832 = vmatpush1.msra.mxu0 0.0
    %1833 = vmatprep.subr.mxu0 0.0
    %1834 = vmatpush1.msra.mxu0 0.0
    %1835 = vmatprep.subr.mxu0 0.0
    %1836 = vmatpush1.msra.mxu0 0.0
    %1837 = vmatprep.subr.mxu0 0.0
    %1838 = vmatpush1.msra.mxu0 0.0
    %1839 = vmatprep.subr.mxu0 0.0
    %1840 = vmatpush1.msra.mxu0 0.0
    %1841 = vmatprep.subr.mxu0 0.0
    %1842 = vmatpush1.msra.mxu0 0.0
    %1843 = vmatprep.subr.mxu0 0.0
    %1844 = vmatpush1.msra.mxu0 0.0
    %1845 = vmatprep.subr.mxu0 0.0
    %1846 = vmatpush1.msra.mxu0 0.0
    %1847 = vmatprep.subr.mxu0 0.0
    %1848 = vmatpush1.msra.mxu0 0.0
    %1849 = vmatprep.subr.mxu0 0.0
    %1850 = vmatpush1.msra.mxu0 0.0
    %1851 = vmatprep.subr.mxu0 0.0
    %1852 = vmatpush1.msra.mxu0 0.0
    %1853 = vmatprep.subr.mxu0 0.0
    %1854 = vmatpush1.msra.mxu0 0.0
    %1855 = vmatprep.subr.mxu0 0.0
    %1856 = vmatpush1.msra.mxu0 %v34
    %1857 = vmatprep.subr.mxu0 0.0
    %1858 = vmatpush1.msra.mxu0 %v33
    %1859 = vmatprep.subr.mxu0 0.0
    %1860 = vmatpush1.msra.mxu0 %v32
    %1861 = vmatprep.subr.mxu0 0.0
    %1862 = vmatpush1.msra.mxu0 %v31
    %1863 = vmatprep.subr.mxu0 0.0
    %1864 = vmatpush2.msra.mxu0 0.0
    %1865 = vmatprep.subr.mxu0 0.0
    %1866 = vmatpush2.msra.mxu0 0.0
    %1867 = vmatprep.subr.mxu0 0.0
    %1868 = vmatpush2.msra.mxu0 0.0
    %1869 = vmatprep.subr.mxu0 0.0
    %1870 = vmatpush2.msra.mxu0 0.0
    %1871 = vmatprep.subr.mxu0 0.0
    %1872 = vmatpush2.msra.mxu0 0.0
    %1873 = vmatprep.subr.mxu0 0.0
    %1874 = vmatpush2.msra.mxu0 0.0
    %1875 = vmatprep.subr.mxu0 0.0
    %1876 = vmatpush2.msra.mxu0 0.0
    %1877 = vmatprep.subr.mxu0 0.0
    %1878 = vmatpush2.msra.mxu0 0.0
    %1879 = vmatprep.subr.mxu0 0.0
    %1880 = vmatpush2.msra.mxu0 0.0
    %1881 = vmatprep.subr.mxu0 0.0
    %1882 = vmatpush2.msra.mxu0 0.0
    %1883 = vmatprep.subr.mxu0 0.0
    %1884 = vmatpush2.msra.mxu0 0.0
    %1885 = vmatprep.subr.mxu0 0.0
    %1886 = vmatpush2.msra.mxu0 0.0
    %1887 = vmatprep.subr.mxu0 0.0
    %1888 = vmatpush2.msra.mxu0 0.0
    %1889 = vmatprep.subr.mxu0 0.0
    %1890 = vmatpush2.msra.mxu0 0.0
    %1891 = vmatprep.subr.mxu0 0.0
    %1892 = vmatpush2.msra.mxu0 0.0
    %1893 = vmatprep.subr.mxu0 0.0
    %1894 = vmatpush2.msra.mxu0 0.0
    %1895 = vmatprep.mubr.f32.mxu0 0.0
    %1896 = vmatmul.mubr.f32.gmra.mxu0 %v1829
    %v1897 = vpop.f32.mrf.mxu0
    %v1898 = vadd.f32 %v1826, %v1897
    %v1899 = vpop.f32.mrf.mxu0
    %1900 = vdwg.mxu0
    %v1901 = vadd.f32 %v1898, %v1020
    %1902 = vst [vmem:[#allocation2] sm:$0xff] %v1901
    // Predicated region
    $region34: #{tpu_custom_call.1} parent=1 // pred_check
      _
    $region35: #{tpu_custom_call.1} parent=1 // pred_check_branch
      %1904 = sbr.rel (0) target = $region37
    $region36: #{tpu_custom_call.1} parent=1 // pred_region
      %s1906 = ssub.s32 128, 128
      %1907 = vsyncadd [#allocation3], %s1906
      %s1909 = sshll.u32 [#allocation2], 4
      %s1910 = int_to_ptr.vmem [resolvable:$true] %s1909
      %1912 = dma.vmem_to_hbm [thread:$0]  %s1910, 128, %s8, [#allocation3]
    $region37: #{tpu_custom_call.1} parent=1 // pred_fallthru
      _
    // Predicated region
    $region38: #{tpu_custom_call.1} parent=1 // pred_check
      _
    $region39: #{tpu_custom_call.1} parent=1 // pred_check_branch
      %1914 = sbr.rel (0) target = $region41
    $region40: #{tpu_custom_call.1} parent=1 // pred_region
      %1915 = dma.done [#allocation3], 128
    $region41: #{tpu_custom_call.1} parent=1 // pred_fallthru
      _
    %1916 = vsyncpa [#allocation3], 1

</llo_original>
